<compile_context>
chip_gen: v5e
topology: v5e:2x2
jax: 0.10.0
libtpu: 0.0.40
codegen_flags: <defaults>
</compile_context>

<pallas_src>
import functools
import math

import jax
import jax.numpy as jnp
from jax import lax
from jax.experimental import pallas as pl
from jax.experimental.pallas import tpu as pltpu


def attention_block_kernel(x_full_ref, x_q_ref, gamma_ref, beta_ref, gavg_ref,
                           wq_ref, bq_ref, wk_ref, bk_ref, wv_ref, bv_ref,
                           wp_ref, bp_ref,
                           o_ref,
                           sc_scr, sh_scr, k_scr, v_scr,
                           *, seq_len, kv_tile, eps):
    qi = pl.program_id(1)

    # ---- once per batch element (qi == 0): GroupNorm stats + K/V projections ----
    @pl.when(qi == 0)
    def _prepare():
        x = x_full_ref[...]                                     # (S, Cp) f32
        ch_sum = jnp.sum(x, axis=0, keepdims=True)              # (1, Cp)
        ch_sq = jnp.sum(x * x, axis=0, keepdims=True)           # (1, Cp)
        mean_c = jnp.dot(ch_sum, gavg_ref[...], preferred_element_type=jnp.float32)
        ex2_c = jnp.dot(ch_sq, gavg_ref[...], preferred_element_type=jnp.float32)
        var_c = jnp.maximum(ex2_c - mean_c * mean_c, 0.0)       # clamp cancellation
        sc = lax.rsqrt(var_c + eps) * gamma_ref[...]            # fused scale
        sh = beta_ref[...] - mean_c * sc                        # fused shift
        sc_scr[...] = sc
        sh_scr[...] = sh
        h = (x * sc + sh).astype(jnp.bfloat16)                  # normalized full slab
        k_scr[...] = (jnp.dot(h, wk_ref[...], preferred_element_type=jnp.float32)
                      + bk_ref[...]).astype(jnp.bfloat16)
        v_scr[...] = (jnp.dot(h, wv_ref[...], preferred_element_type=jnp.float32)
                      + bv_ref[...]).astype(jnp.bfloat16)

    sc = sc_scr[...]
    sh = sh_scr[...]

    # ---- q projection for this query tile (softmax scale folded into wq/bq) ----
    hq = (x_q_ref[...] * sc + sh).astype(jnp.bfloat16)          # (TQ, Cp)
    q = (jnp.dot(hq, wq_ref[...], preferred_element_type=jnp.float32)
         + bq_ref[...]).astype(jnp.bfloat16)

    tq = q.shape[0]
    cp = q.shape[1]
    num_kv = seq_len // kv_tile

    # ---- online-softmax (flash) loop over KV tiles ----
    def kv_step(t, carry):
        m_i, l_i, acc = carry
        start = pl.multiple_of(t * kv_tile, kv_tile)
        k_t = k_scr[pl.ds(start, kv_tile), :]                   # (TK, Cp) bf16
        v_t = v_scr[pl.ds(start, kv_tile), :]
        # contraction over last dims -> no k.T transpose
        s = lax.dot_general(q, k_t, (((1,), (1,)), ((), ())),
                            preferred_element_type=jnp.float32)  # (TQ, TK) f32
        m_new = jnp.maximum(m_i, jnp.max(s, axis=-1, keepdims=True))
        alpha = jnp.exp(m_i - m_new)
        p = jnp.exp(s - m_new)
        l_new = alpha * l_i + jnp.sum(p, axis=-1, keepdims=True)
        acc_new = alpha * acc + jnp.dot(p.astype(jnp.bfloat16), v_t,
                                        preferred_element_type=jnp.float32)
        return m_new, l_new, acc_new

    m0 = jnp.full((tq, 1), -jnp.inf, dtype=jnp.float32)
    l0 = jnp.zeros((tq, 1), dtype=jnp.float32)
    a0 = jnp.zeros((tq, cp), dtype=jnp.float32)
    _, l_f, acc_f = lax.fori_loop(0, num_kv, kv_step, (m0, l0, a0),
                                  unroll=num_kv <= 8)

    # TODO(synk): dropout (dropout_probability > 0) not implemented; module default is 0.0.
    attn = (acc_f * pl.reciprocal(l_f, approx=True)).astype(jnp.bfloat16)

    # ---- output 1x1 conv + residual (re-read x tile to keep live range short) ----
    out = jnp.dot(attn, wp_ref[...], preferred_element_type=jnp.float32) + bp_ref[...]
    o_ref[...] = x_q_ref[...] + out


def _pick_tile(s, target):
    """Largest divisor of s that is <= target and a multiple of 8 (or s itself)."""
    for t in range(min(s, target), 0, -1):
        if s % t == 0 and (t % 8 == 0 or t == s):
            return t
    return s


def attention_block(x_nchw, gamma, beta, wqkv_t, bqkv, wproj_t, bproj,
                    eps=1e-6, tq=None, tk=None):
    B, C, H, W = x_nchw.shape
    assert C % 32 == 0, "GroupNorm(num_groups=32) requires channels % 32 == 0"
    S = H * W
    G = 32
    gs = C // G
    Cp = ((C + 127) // 128) * 128          # lane-dense channel padding
    scale = 1.0 / math.sqrt(C)             # SDPA scale uses the *real* channel count

    # Tile budgets: modest defaults that keep the per-step working set small even on
    # v7x (64 MiB VMEM); the resident cost scales with S*Cp (full-x block + K/V scratch).
    if tq is None:
        tq = _pick_tile(S, 256)
    if tk is None:
        tk = _pick_tile(S, 512)
    assert S % tq == 0 and S % tk == 0
    n_q = S // tq

    # ---- plain-JAX glue: layout + parameter packing ----
    x_seq = jnp.transpose(x_nchw, (0, 2, 3, 1)).reshape(B, S, C).astype(jnp.float32)
    if Cp != C:
        x_seq = jnp.pad(x_seq, ((0, 0), (0, 0), (0, Cp - C)))

    # group-averaging matrix: gavg[c', c] = 1/(S*gs) iff c', c real and in same group
    group_id = jnp.arange(C) // gs
    gavg = (group_id[:, None] == group_id[None, :]).astype(jnp.float32) / float(S * gs)
    gavg_p = jnp.zeros((Cp, Cp), jnp.float32).at[:C, :C].set(gavg)

    def pad_w(w):   # (C, C) -> (Cp, Cp) bf16 MXU operand
        return jnp.zeros((Cp, Cp), jnp.float32).at[:C, :C].set(
            w.astype(jnp.float32)).astype(jnp.bfloat16)

    def pad_v(v):   # (C,) -> (1, Cp) f32
        return jnp.zeros((1, Cp), jnp.float32).at[0, :C].set(v.astype(jnp.float32))

    wq_p = pad_w(wqkv_t[:, :C] * scale)          # fold softmax scale into q weight
    wk_p = pad_w(wqkv_t[:, C:2 * C])
    wv_p = pad_w(wqkv_t[:, 2 * C:])
    wp_p = pad_w(wproj_t)
    bq_p = pad_v(bqkv[:C] * scale)               # fold softmax scale into q bias
    bk_p = pad_v(bqkv[C:2 * C])
    bv_p = pad_v(bqkv[2 * C:])
    bp_p = pad_v(bproj)
    gamma_p = pad_v(gamma)
    beta_p = pad_v(beta)

    kernel = functools.partial(attention_block_kernel,
                               seq_len=S, kv_tile=tk, eps=float(eps))

    flops = int(B * (8 * S * Cp * Cp + 4 * S * S * Cp))
    cost = pl.CostEstimate(flops=flops,
                           transcendentals=int(B * S * S),
                           bytes_accessed=int(3 * B * S * Cp * 4 + 5 * Cp * Cp * 4))
    vmem_est = (4 * S * Cp * 4              # full-x block (double-buffered, f32)
                + 8 * tq * Cp * 4           # x_q + out tiles (double-buffered)
                + 2 * S * Cp * 2            # K/V scratch (bf16)
                + 10 * Cp * Cp * 4)         # weights + gavg (generous)
    vmem_limit = int(min(100 * 2**20, max(32 * 2**20, 2 * vmem_est)))

    out_pad = pl.pallas_call(
        kernel,
        out_shape=jax.ShapeDtypeStruct((B, S, Cp), jnp.float32),
        grid=(B, n_q),
        in_specs=[
            pl.BlockSpec((None, S, Cp), lambda b, i: (b, 0, 0)),    # full x (stats + K/V)
            pl.BlockSpec((None, tq, Cp), lambda b, i: (b, i, 0)),   # x query tile
            pl.BlockSpec((1, Cp), lambda b, i: (0, 0)),             # gamma
            pl.BlockSpec((1, Cp), lambda b, i: (0, 0)),             # beta
            pl.BlockSpec((Cp, Cp), lambda b, i: (0, 0)),            # group-average matrix
            pl.BlockSpec((Cp, Cp), lambda b, i: (0, 0)),            # wq (scaled)
            pl.BlockSpec((1, Cp), lambda b, i: (0, 0)),             # bq (scaled)
            pl.BlockSpec((Cp, Cp), lambda b, i: (0, 0)),            # wk
            pl.BlockSpec((1, Cp), lambda b, i: (0, 0)),             # bk
            pl.BlockSpec((Cp, Cp), lambda b, i: (0, 0)),            # wv
            pl.BlockSpec((1, Cp), lambda b, i: (0, 0)),             # bv
            pl.BlockSpec((Cp, Cp), lambda b, i: (0, 0)),            # wproj
            pl.BlockSpec((1, Cp), lambda b, i: (0, 0)),             # bproj
        ],
        out_specs=pl.BlockSpec((None, tq, Cp), lambda b, i: (b, i, 0)),
        scratch_shapes=[
            pltpu.VMEM((1, Cp), jnp.float32),       # fused GroupNorm scale
            pltpu.VMEM((1, Cp), jnp.float32),       # fused GroupNorm shift
            pltpu.VMEM((S, Cp), jnp.bfloat16),      # K for current batch element
            pltpu.VMEM((S, Cp), jnp.bfloat16),      # V for current batch element
        ],
        compiler_params=pltpu.CompilerParams(
            # qi axis must stay "arbitrary": K/V scratch filled at qi==0 is reused
            # by later query tiles of the same batch element. Batch axis is parallel.
            dimension_semantics=("parallel", "arbitrary"),
            vmem_limit_bytes=vmem_limit),
        cost_estimate=cost,
    )(x_seq, x_seq, gamma_p, beta_p, gavg_p,
      wq_p, bq_p, wk_p, bk_p, wv_p, bv_p, wp_p, bp_p)

    out_seq = out_pad[:, :, :C]
    return jnp.transpose(out_seq.reshape(B, H, W, C), (0, 3, 1, 2)).astype(x_nchw.dtype)


def reference(x_nchw, gamma, beta, wqkv_t, bqkv, wproj_t, bproj, eps=1e-6):
    """Plain-JAX f32 reference mirroring the PyTorch module semantics."""
    B, C, H, W = x_nchw.shape
    G = 32
    gs = C // G
    xg = x_nchw.reshape(B, G, gs, H, W)
    mean = xg.mean(axis=(2, 3, 4), keepdims=True)
    var = xg.var(axis=(2, 3, 4), keepdims=True)
    xn = ((xg - mean) / jnp.sqrt(var + eps)).reshape(B, C, H, W)
    h = xn * gamma[None, :, None, None] + beta[None, :, None, None]
    hs = jnp.transpose(h, (0, 2, 3, 1)).reshape(B, H * W, C)
    qkv = hs @ wqkv_t + bqkv
    q, k, v = jnp.split(qkv, 3, axis=-1)
    s = (q @ jnp.transpose(k, (0, 2, 1))) / jnp.sqrt(jnp.float32(C))
    p = jax.nn.softmax(s, axis=-1)
    a = p @ v
    out = a @ wproj_t + bproj
    out = jnp.transpose(out.reshape(B, H, W, C), (0, 3, 1, 2))
    return x_nchw + out


if __name__ == "__main__":
    # GroupNorm(num_groups=32) requires channels % 32 == 0 -> smallest sensible C is 32.
    # H = W = 16 gives S = 256 so tq = tk = 128 exercises the query grid (2 tiles)
    # and the online-softmax KV loop (2 steps).
    B, C, H, W = 2, 32, 16, 16

    key = jax.random.PRNGKey(0)
    kx, kq, kbq, kp, kbp = jax.random.split(key, 5)

    x = jax.random.normal(kx, (B, C, H, W), dtype=jnp.float32)

    fan_in = C  # 1x1 conv: in_channels * 1 * 1
    wqkv_t = jax.random.normal(kq, (C, 3 * C), dtype=jnp.float32) / math.sqrt(fan_in)
    bqkv = jax.random.uniform(kbq, (3 * C,), dtype=jnp.float32,
                              minval=-1.0 / math.sqrt(fan_in), maxval=1.0 / math.sqrt(fan_in))
    wproj_t = jax.random.normal(kp, (C, C), dtype=jnp.float32) / math.sqrt(fan_in)
    bproj = jax.random.uniform(kbp, (C,), dtype=jnp.float32,
                               minval=-1.0 / math.sqrt(fan_in), maxval=1.0 / math.sqrt(fan_in))
    gamma = jnp.ones((C,), dtype=jnp.float32)   # GroupNorm affine defaults
    beta = jnp.zeros((C,), dtype=jnp.float32)

    out = attention_block(x, gamma, beta, wqkv_t, bqkv, wproj_t, bproj, tq=128, tk=128)
    out = jax.block_until_ready(out)

    ref = reference(x, gamma, beta, wqkv_t, bqkv, wproj_t, bproj)
    assert out.shape == (B, C, H, W)
    # bf16 MXU operands (f32 accumulation) + approx reciprocal -> relaxed tolerance.
    assert jnp.allclose(out, ref, rtol=5e-2, atol=5e-2), \
        f"max abs err = {jnp.max(jnp.abs(out - ref))}"

    print("KERNEL_OK")
</pallas_src>

<mosaic_0001>
module attributes {stable_mosaic.version = 11 : i64} {
  func.func @attention_block_kernel(%arg0: i32, %arg1: i32, %arg2: memref<1x256x128xf32, #tpu.memory_space<vmem>>, %arg3: memref<1x128x128xf32, #tpu.memory_space<vmem>>, %arg4: memref<1x128xf32, #tpu.memory_space<vmem>>, %arg5: memref<1x128xf32, #tpu.memory_space<vmem>>, %arg6: memref<128x128xf32, #tpu.memory_space<vmem>>, %arg7: memref<128x128xbf16, #tpu.memory_space<vmem>>, %arg8: memref<1x128xf32, #tpu.memory_space<vmem>>, %arg9: memref<128x128xbf16, #tpu.memory_space<vmem>>, %arg10: memref<1x128xf32, #tpu.memory_space<vmem>>, %arg11: memref<128x128xbf16, #tpu.memory_space<vmem>>, %arg12: memref<1x128xf32, #tpu.memory_space<vmem>>, %arg13: memref<128x128xbf16, #tpu.memory_space<vmem>>, %arg14: memref<1x128xf32, #tpu.memory_space<vmem>>, %arg15: memref<1x128x128xf32, #tpu.memory_space<vmem>>, %arg16: memref<1x128xf32, #tpu.memory_space<vmem>>, %arg17: memref<1x128xf32, #tpu.memory_space<vmem>>, %arg18: memref<256x128xbf16, #tpu.memory_space<vmem>>, %arg19: memref<256x128xbf16, #tpu.memory_space<vmem>>) attributes {dimension_semantics = [#tpu.dimension_semantics<parallel>, #tpu.dimension_semantics<arbitrary>], iteration_bounds = array<i64: 2, 2>, scalar_prefetch = 0 : i64, scratch_operands = 4 : i64, tpu.core_type = #tpu.core_type<tc>, window_params = [{transform_indices = @transform_0, window_bounds = array<i64: 1, 256, 128>}, {transform_indices = @transform_1, window_bounds = array<i64: 1, 128, 128>}, {pipeline_mode = #tpu.pipeline_mode<synchronous>, transform_indices = @transform_2, window_bounds = array<i64: 1, 128>}, {pipeline_mode = #tpu.pipeline_mode<synchronous>, transform_indices = @transform_3, window_bounds = array<i64: 1, 128>}, {pipeline_mode = #tpu.pipeline_mode<synchronous>, transform_indices = @transform_4, window_bounds = array<i64: 128, 128>}, {pipeline_mode = #tpu.pipeline_mode<synchronous>, transform_indices = @transform_5, window_bounds = array<i64: 128, 128>}, {pipeline_mode = #tpu.pipeline_mode<synchronous>, transform_indices = @transform_6, window_bounds = array<i64: 1, 128>}, {pipeline_mode = #tpu.pipeline_mode<synchronous>, transform_indices = @transform_7, window_bounds = array<i64: 128, 128>}, {pipeline_mode = #tpu.pipeline_mode<synchronous>, transform_indices = @transform_8, window_bounds = array<i64: 1, 128>}, {pipeline_mode = #tpu.pipeline_mode<synchronous>, transform_indices = @transform_9, window_bounds = array<i64: 128, 128>}, {pipeline_mode = #tpu.pipeline_mode<synchronous>, transform_indices = @transform_10, window_bounds = array<i64: 1, 128>}, {pipeline_mode = #tpu.pipeline_mode<synchronous>, transform_indices = @transform_11, window_bounds = array<i64: 128, 128>}, {pipeline_mode = #tpu.pipeline_mode<synchronous>, transform_indices = @transform_12, window_bounds = array<i64: 1, 128>}, {transform_indices = @transform_13, window_bounds = array<i64: 1, 128, 128>}]} {
    %c0_i32 = arith.constant 0 : i32
    %0 = arith.cmpi eq, %arg1, %c0_i32 : i32
    %1 = arith.extui %0 : i1 to i32
    %c0_i32_0 = arith.constant 0 : i32
    %2 = arith.cmpi ne, %1, %c0_i32_0 : i32
    scf.if %2 {
      %c0_39 = arith.constant 0 : index
      %c0_40 = arith.constant 0 : index
      %c0_41 = arith.constant 0 : index
      %84 = vector.load %arg2[%c0_39, %c0_40, %c0_41] : memref<1x256x128xf32, #tpu.memory_space<vmem>>, vector<1x256x128xf32>
      %85 = vector.shape_cast %84 : vector<1x256x128xf32> to vector<256x128xf32>
      %cst_42 = arith.constant dense<0.000000e+00> : vector<128xf32>
      %86 = vector.multi_reduction <add>, %85, %cst_42 [0] : vector<256x128xf32> to vector<128xf32>
      %87 = vector.shape_cast %86 : vector<128xf32> to vector<1x128xf32>
      %88 = arith.mulf %85, %85 : vector<256x128xf32>
      %cst_43 = arith.constant dense<0.000000e+00> : vector<128xf32>
      %89 = vector.multi_reduction <add>, %88, %cst_43 [0] : vector<256x128xf32> to vector<128xf32>
      %90 = vector.shape_cast %89 : vector<128xf32> to vector<1x128xf32>
      %c0_44 = arith.constant 0 : index
      %c0_45 = arith.constant 0 : index
      %91 = vector.load %arg6[%c0_44, %c0_45] : memref<128x128xf32, #tpu.memory_space<vmem>>, vector<128x128xf32>
      %cst_46 = arith.constant dense<0.000000e+00> : vector<1x128xf32>
      %92 = tpu.matmul %87, %91, %cst_46 {dimension_numbers = #tpu.dot_dimension_numbers<[1], [0], [0], [1], [0, 0, 1, 1], [], []>} : vector<1x128xf32>, vector<128x128xf32>, vector<1x128xf32> -> vector<1x128xf32>
      %c0_47 = arith.constant 0 : index
      %c0_48 = arith.constant 0 : index
      %93 = vector.load %arg6[%c0_47, %c0_48] : memref<128x128xf32, #tpu.memory_space<vmem>>, vector<128x128xf32>
      %cst_49 = arith.constant dense<0.000000e+00> : vector<1x128xf32>
      %94 = tpu.matmul %90, %93, %cst_49 {dimension_numbers = #tpu.dot_dimension_numbers<[1], [0], [0], [1], [0, 0, 1, 1], [], []>} : vector<1x128xf32>, vector<128x128xf32>, vector<1x128xf32> -> vector<1x128xf32>
      %95 = arith.mulf %92, %92 : vector<1x128xf32>
      %96 = arith.subf %94, %95 : vector<1x128xf32>
      %cst_50 = arith.constant 0.000000e+00 : f32
      %97 = vector.broadcast %cst_50 : f32 to vector<1x128xf32>
      %98 = arith.maximumf %96, %97 : vector<1x128xf32>
      %cst_51 = arith.constant 9.99999997E-7 : f32
      %99 = vector.broadcast %cst_51 : f32 to vector<1x128xf32>
      %100 = arith.addf %98, %99 : vector<1x128xf32>
      %101 = math.rsqrt %100 : vector<1x128xf32>
      %c0_52 = arith.constant 0 : index
      %c0_53 = arith.constant 0 : index
      %102 = vector.load %arg4[%c0_52, %c0_53] : memref<1x128xf32, #tpu.memory_space<vmem>>, vector<1x128xf32>
      %103 = arith.mulf %101, %102 : vector<1x128xf32>
      %c0_54 = arith.constant 0 : index
      %c0_55 = arith.constant 0 : index
      %104 = vector.load %arg5[%c0_54, %c0_55] : memref<1x128xf32, #tpu.memory_space<vmem>>, vector<1x128xf32>
      %105 = arith.mulf %92, %103 : vector<1x128xf32>
      %106 = arith.subf %104, %105 : vector<1x128xf32>
      %c0_56 = arith.constant 0 : index
      %c0_57 = arith.constant 0 : index
      %107 = vector.load %arg16[%c0_56, %c0_57] : memref<1x128xf32, #tpu.memory_space<vmem>>, vector<1x128xf32>
      tpu.vector_store %arg16[%c0_56, %c0_57], %103 {strides = array<i32>} : memref<1x128xf32, #tpu.memory_space<vmem>>, vector<1x128xf32>,
      %c0_58 = arith.constant 0 : index
      %c0_59 = arith.constant 0 : index
      %108 = vector.load %arg17[%c0_58, %c0_59] : memref<1x128xf32, #tpu.memory_space<vmem>>, vector<1x128xf32>
      tpu.vector_store %arg17[%c0_58, %c0_59], %106 {strides = array<i32>} : memref<1x128xf32, #tpu.memory_space<vmem>>, vector<1x128xf32>,
      %109 = vector.broadcast %103 : vector<1x128xf32> to vector<256x128xf32>
      %110 = arith.mulf %85, %109 : vector<256x128xf32>
      %111 = vector.broadcast %106 : vector<1x128xf32> to vector<256x128xf32>
      %112 = arith.addf %110, %111 : vector<256x128xf32>
      %113 = arith.truncf %112 : vector<256x128xf32> to vector<256x128xbf16>
      %c0_60 = arith.constant 0 : index
      %c0_61 = arith.constant 0 : index
      %114 = vector.load %arg9[%c0_60, %c0_61] : memref<128x128xbf16, #tpu.memory_space<vmem>>, vector<128x128xbf16>
      %cst_62 = arith.constant dense<0.000000e+00> : vector<256x128xf32>
      %115 = tpu.matmul %113, %114, %cst_62 {dimension_numbers = #tpu.dot_dimension_numbers<[1], [0], [0], [1], [0, 0, 1, 1], [], []>} : vector<256x128xbf16>, vector<128x128xbf16>, vector<256x128xf32> -> vector<256x128xf32>
      %c0_63 = arith.constant 0 : index
      %c0_64 = arith.constant 0 : index
      %116 = vector.load %arg10[%c0_63, %c0_64] : memref<1x128xf32, #tpu.memory_space<vmem>>, vector<1x128xf32>
      %117 = vector.broadcast %116 : vector<1x128xf32> to vector<256x128xf32>
      %118 = arith.addf %115, %117 : vector<256x128xf32>
      %119 = arith.truncf %118 : vector<256x128xf32> to vector<256x128xbf16>
      %c0_65 = arith.constant 0 : index
      %c0_66 = arith.constant 0 : index
      %120 = vector.load %arg18[%c0_65, %c0_66] : memref<256x128xbf16, #tpu.memory_space<vmem>>, vector<256x128xbf16>
      tpu.vector_store %arg18[%c0_65, %c0_66], %119 {strides = array<i32>} : memref<256x128xbf16, #tpu.memory_space<vmem>>, vector<256x128xbf16>,
      %c0_67 = arith.constant 0 : index
      %c0_68 = arith.constant 0 : index
      %121 = vector.load %arg11[%c0_67, %c0_68] : memref<128x128xbf16, #tpu.memory_space<vmem>>, vector<128x128xbf16>
      %cst_69 = arith.constant dense<0.000000e+00> : vector<256x128xf32>
      %122 = tpu.matmul %113, %121, %cst_69 {dimension_numbers = #tpu.dot_dimension_numbers<[1], [0], [0], [1], [0, 0, 1, 1], [], []>} : vector<256x128xbf16>, vector<128x128xbf16>, vector<256x128xf32> -> vector<256x128xf32>
      %c0_70 = arith.constant 0 : index
      %c0_71 = arith.constant 0 : index
      %123 = vector.load %arg12[%c0_70, %c0_71] : memref<1x128xf32, #tpu.memory_space<vmem>>, vector<1x128xf32>
      %124 = vector.broadcast %123 : vector<1x128xf32> to vector<256x128xf32>
      %125 = arith.addf %122, %124 : vector<256x128xf32>
      %126 = arith.truncf %125 : vector<256x128xf32> to vector<256x128xbf16>
      %c0_72 = arith.constant 0 : index
      %c0_73 = arith.constant 0 : index
      %127 = vector.load %arg19[%c0_72, %c0_73] : memref<256x128xbf16, #tpu.memory_space<vmem>>, vector<256x128xbf16>
      tpu.vector_store %arg19[%c0_72, %c0_73], %126 {strides = array<i32>} : memref<256x128xbf16, #tpu.memory_space<vmem>>, vector<256x128xbf16>,
    } else {
    }
    %c0 = arith.constant 0 : index
    %c0_1 = arith.constant 0 : index
    %3 = vector.load %arg16[%c0, %c0_1] : memref<1x128xf32, #tpu.memory_space<vmem>>, vector<1x128xf32>
    %c0_2 = arith.constant 0 : index
    %c0_3 = arith.constant 0 : index
    %4 = vector.load %arg17[%c0_2, %c0_3] : memref<1x128xf32, #tpu.memory_space<vmem>>, vector<1x128xf32>
    %c0_4 = arith.constant 0 : index
    %c0_5 = arith.constant 0 : index
    %c0_6 = arith.constant 0 : index
    %5 = vector.load %arg3[%c0_4, %c0_5, %c0_6] : memref<1x128x128xf32, #tpu.memory_space<vmem>>, vector<1x128x128xf32>
    %6 = vector.shape_cast %5 : vector<1x128x128xf32> to vector<128x128xf32>
    %7 = vector.broadcast %3 : vector<1x128xf32> to vector<128x128xf32>
    %8 = arith.mulf %6, %7 : vector<128x128xf32>
    %9 = vector.broadcast %4 : vector<1x128xf32> to vector<128x128xf32>
    %10 = arith.addf %8, %9 : vector<128x128xf32>
    %11 = arith.truncf %10 : vector<128x128xf32> to vector<128x128xbf16>
    %c0_7 = arith.constant 0 : index
    %c0_8 = arith.constant 0 : index
    %12 = vector.load %arg7[%c0_7, %c0_8] : memref<128x128xbf16, #tpu.memory_space<vmem>>, vector<128x128xbf16>
    %cst = arith.constant dense<0.000000e+00> : vector<128x128xf32>
    %13 = tpu.matmul %11, %12, %cst {dimension_numbers = #tpu.dot_dimension_numbers<[1], [0], [0], [1], [0, 0, 1, 1], [], []>} : vector<128x128xbf16>, vector<128x128xbf16>, vector<128x128xf32> -> vector<128x128xf32>
    %c0_9 = arith.constant 0 : index
    %c0_10 = arith.constant 0 : index
    %14 = vector.load %arg8[%c0_9, %c0_10] : memref<1x128xf32, #tpu.memory_space<vmem>>, vector<1x128xf32>
    %15 = vector.broadcast %14 : vector<1x128xf32> to vector<128x128xf32>
    %16 = arith.addf %13, %15 : vector<128x128xf32>
    %17 = arith.truncf %16 : vector<128x128xf32> to vector<128x128xbf16>
    %cst_11 = arith.constant 0xFF800000 : f32
    %18 = vector.broadcast %cst_11 : f32 to vector<128x1xf32>
    %cst_12 = arith.constant 0.000000e+00 : f32
    %19 = vector.broadcast %cst_12 : f32 to vector<128x1xf32>
    %cst_13 = arith.constant 0.000000e+00 : f32
    %20 = vector.broadcast %cst_13 : f32 to vector<128x128xf32>
    %c0_i32_14 = arith.constant 0 : i32
    %c128_i32 = arith.constant 128 : i32
    %21 = arith.muli %c0_i32_14, %c128_i32 : i32
    %22 = tpu.assume_multiple %21, 128 : i32
    %23 = arith.index_cast %22 : i32 to index
    %c0_15 = arith.constant 0 : index
    %24 = vector.load %arg18[%23, %c0_15] : memref<256x128xbf16, #tpu.memory_space<vmem>>, vector<128x128xbf16>
    %25 = arith.index_cast %22 : i32 to index
    %c0_16 = arith.constant 0 : index
    %26 = vector.load %arg19[%25, %c0_16] : memref<256x128xbf16, #tpu.memory_space<vmem>>, vector<128x128xbf16>
    %cst_17 = arith.constant dense<0.000000e+00> : vector<128x128xf32>
    %27 = tpu.matmul %17, %24, %cst_17 {dimension_numbers = #tpu.dot_dimension_numbers<[1], [1], [0], [0], [0, 0, 1, 0], [], []>} : vector<128x128xbf16>, vector<128x128xbf16>, vector<128x128xf32> -> vector<128x128xf32>
    %cst_18 = arith.constant dense<0xFF800000> : vector<128xf32>
    %28 = vector.multi_reduction <maximumf>, %27, %cst_18 [1] : vector<128x128xf32> to vector<128xf32>
    %29 = vector.shape_cast %28 : vector<128xf32> to vector<128x1xf32>
    %30 = arith.maximumf %18, %29 : vector<128x1xf32>
    %31 = arith.subf %18, %30 : vector<128x1xf32>
    %32 = math.exp %31 : vector<128x1xf32>
    %33 = vector.broadcast %30 : vector<128x1xf32> to vector<128x128xf32>
    %34 = arith.subf %27, %33 : vector<128x128xf32>
    %35 = math.exp %34 : vector<128x128xf32>
    %36 = arith.mulf %32, %19 : vector<128x1xf32>
    %cst_19 = arith.constant dense<0.000000e+00> : vector<128xf32>
    %37 = vector.multi_reduction <add>, %35, %cst_19 [1] : vector<128x128xf32> to vector<128xf32>
    %38 = vector.shape_cast %37 : vector<128xf32> to vector<128x1xf32>
    %39 = arith.addf %36, %38 : vector<128x1xf32>
    %40 = vector.broadcast %32 : vector<128x1xf32> to vector<128x128xf32>
    %41 = arith.mulf %40, %20 : vector<128x128xf32>
    %42 = arith.truncf %35 : vector<128x128xf32> to vector<128x128xbf16>
    %cst_20 = arith.constant dense<0.000000e+00> : vector<128x128xf32>
    %43 = tpu.matmul %42, %26, %cst_20 {dimension_numbers = #tpu.dot_dimension_numbers<[1], [0], [0], [1], [0, 0, 1, 1], [], []>} : vector<128x128xbf16>, vector<128x128xbf16>, vector<128x128xf32> -> vector<128x128xf32>
    %44 = arith.addf %41, %43 : vector<128x128xf32>
    %c1_i32 = arith.constant 1 : i32
    %c128_i32_21 = arith.constant 128 : i32
    %45 = arith.muli %c1_i32, %c128_i32_21 : i32
    %46 = tpu.assume_multiple %45, 128 : i32
    %47 = arith.index_cast %46 : i32 to index
    %c0_22 = arith.constant 0 : index
    %48 = vector.load %arg18[%47, %c0_22] : memref<256x128xbf16, #tpu.memory_space<vmem>>, vector<128x128xbf16>
    %49 = arith.index_cast %46 : i32 to index
    %c0_23 = arith.constant 0 : index
    %50 = vector.load %arg19[%49, %c0_23] : memref<256x128xbf16, #tpu.memory_space<vmem>>, vector<128x128xbf16>
    %cst_24 = arith.constant dense<0.000000e+00> : vector<128x128xf32>
    %51 = tpu.matmul %17, %48, %cst_24 {dimension_numbers = #tpu.dot_dimension_numbers<[1], [1], [0], [0], [0, 0, 1, 0], [], []>} : vector<128x128xbf16>, vector<128x128xbf16>, vector<128x128xf32> -> vector<128x128xf32>
    %cst_25 = arith.constant dense<0xFF800000> : vector<128xf32>
    %52 = vector.multi_reduction <maximumf>, %51, %cst_25 [1] : vector<128x128xf32> to vector<128xf32>
    %53 = vector.shape_cast %52 : vector<128xf32> to vector<128x1xf32>
    %54 = arith.maximumf %30, %53 : vector<128x1xf32>
    %55 = arith.subf %30, %54 : vector<128x1xf32>
    %56 = math.exp %55 : vector<128x1xf32>
    %57 = vector.broadcast %54 : vector<128x1xf32> to vector<128x128xf32>
    %58 = arith.subf %51, %57 : vector<128x128xf32>
    %59 = math.exp %58 : vector<128x128xf32>
    %60 = arith.mulf %56, %39 : vector<128x1xf32>
    %cst_26 = arith.constant dense<0.000000e+00> : vector<128xf32>
    %61 = vector.multi_reduction <add>, %59, %cst_26 [1] : vector<128x128xf32> to vector<128xf32>
    %62 = vector.shape_cast %61 : vector<128xf32> to vector<128x1xf32>
    %63 = arith.addf %60, %62 : vector<128x1xf32>
    %64 = vector.broadcast %56 : vector<128x1xf32> to vector<128x128xf32>
    %65 = arith.mulf %64, %44 : vector<128x128xf32>
    %66 = arith.truncf %59 : vector<128x128xf32> to vector<128x128xbf16>
    %cst_27 = arith.constant dense<0.000000e+00> : vector<128x128xf32>
    %67 = tpu.matmul %66, %50, %cst_27 {dimension_numbers = #tpu.dot_dimension_numbers<[1], [0], [0], [1], [0, 0, 1, 1], [], []>} : vector<128x128xbf16>, vector<128x128xbf16>, vector<128x128xf32> -> vector<128x128xf32>
    %68 = arith.addf %65, %67 : vector<128x128xf32>
    %c2_i32 = arith.constant 2 : i32
    %69 = tpu.reciprocal %63 {approx = true} : vector<128x1xf32> -> vector<128x1xf32>
    %70 = vector.broadcast %69 : vector<128x1xf32> to vector<128x128xf32>
    %71 = arith.mulf %68, %70 : vector<128x128xf32>
    %72 = arith.truncf %71 : vector<128x128xf32> to vector<128x128xbf16>
    %c0_28 = arith.constant 0 : index
    %c0_29 = arith.constant 0 : index
    %73 = vector.load %arg13[%c0_28, %c0_29] : memref<128x128xbf16, #tpu.memory_space<vmem>>, vector<128x128xbf16>
    %cst_30 = arith.constant dense<0.000000e+00> : vector<128x128xf32>
    %74 = tpu.matmul %72, %73, %cst_30 {dimension_numbers = #tpu.dot_dimension_numbers<[1], [0], [0], [1], [0, 0, 1, 1], [], []>} : vector<128x128xbf16>, vector<128x128xbf16>, vector<128x128xf32> -> vector<128x128xf32>
    %c0_31 = arith.constant 0 : index
    %c0_32 = arith.constant 0 : index
    %75 = vector.load %arg14[%c0_31, %c0_32] : memref<1x128xf32, #tpu.memory_space<vmem>>, vector<1x128xf32>
    %76 = vector.broadcast %75 : vector<1x128xf32> to vector<128x128xf32>
    %77 = arith.addf %74, %76 : vector<128x128xf32>
    %c0_33 = arith.constant 0 : index
    %c0_34 = arith.constant 0 : index
    %c0_35 = arith.constant 0 : index
    %78 = vector.load %arg3[%c0_33, %c0_34, %c0_35] : memref<1x128x128xf32, #tpu.memory_space<vmem>>, vector<1x128x128xf32>
    %79 = vector.shape_cast %78 : vector<1x128x128xf32> to vector<128x128xf32>
    %80 = arith.addf %79, %77 : vector<128x128xf32>
    %c0_36 = arith.constant 0 : index
    %c0_37 = arith.constant 0 : index
    %c0_38 = arith.constant 0 : index
    %81 = vector.load %arg15[%c0_36, %c0_37, %c0_38] : memref<1x128x128xf32, #tpu.memory_space<vmem>>, vector<1x128x128xf32>
    %82 = vector.shape_cast %81 : vector<1x128x128xf32> to vector<128x128xf32>
    %83 = vector.shape_cast %80 : vector<128x128xf32> to vector<1x128x128xf32>
    tpu.vector_store %arg15[%c0_36, %c0_37, %c0_38], %83 {strides = array<i32>} : memref<1x128x128xf32, #tpu.memory_space<vmem>>, vector<1x128x128xf32>,
    return
  }
  func.func @transform_0(%arg0: i32, %arg1: i32) -> (i32, i32, i32) {
    %c0_i32 = arith.constant 0 : i32
    %c0_i32_0 = arith.constant 0 : i32
    %c0_i32_1 = arith.constant 0 : i32
    return %arg0, %c0_i32, %c0_i32_0 : i32, i32, i32
  }
  func.func @transform_1(%arg0: i32, %arg1: i32) -> (i32, i32, i32) {
    %c0_i32 = arith.constant 0 : i32
    %c0_i32_0 = arith.constant 0 : i32
    return %arg0, %arg1, %c0_i32 : i32, i32, i32
  }
  func.func @transform_2(%arg0: i32, %arg1: i32) -> (i32, i32) {
    %c0_i32 = arith.constant 0 : i32
    %c0_i32_0 = arith.constant 0 : i32
    %c0_i32_1 = arith.constant 0 : i32
    return %c0_i32, %c0_i32_0 : i32, i32
  }
  func.func @transform_3(%arg0: i32, %arg1: i32) -> (i32, i32) {
    %c0_i32 = arith.constant 0 : i32
    %c0_i32_0 = arith.constant 0 : i32
    %c0_i32_1 = arith.constant 0 : i32
    return %c0_i32, %c0_i32_0 : i32, i32
  }
  func.func @transform_4(%arg0: i32, %arg1: i32) -> (i32, i32) {
    %c0_i32 = arith.constant 0 : i32
    %c0_i32_0 = arith.constant 0 : i32
    %c0_i32_1 = arith.constant 0 : i32
    return %c0_i32, %c0_i32_0 : i32, i32
  }
  func.func @transform_5(%arg0: i32, %arg1: i32) -> (i32, i32) {
    %c0_i32 = arith.constant 0 : i32
    %c0_i32_0 = arith.constant 0 : i32
    %c0_i32_1 = arith.constant 0 : i32
    return %c0_i32, %c0_i32_0 : i32, i32
  }
  func.func @transform_6(%arg0: i32, %arg1: i32) -> (i32, i32) {
    %c0_i32 = arith.constant 0 : i32
    %c0_i32_0 = arith.constant 0 : i32
    %c0_i32_1 = arith.constant 0 : i32
    return %c0_i32, %c0_i32_0 : i32, i32
  }
  func.func @transform_7(%arg0: i32, %arg1: i32) -> (i32, i32) {
    %c0_i32 = arith.constant 0 : i32
    %c0_i32_0 = arith.constant 0 : i32
    %c0_i32_1 = arith.constant 0 : i32
    return %c0_i32, %c0_i32_0 : i32, i32
  }
  func.func @transform_8(%arg0: i32, %arg1: i32) -> (i32, i32) {
    %c0_i32 = arith.constant 0 : i32
    %c0_i32_0 = arith.constant 0 : i32
    %c0_i32_1 = arith.constant 0 : i32
    return %c0_i32, %c0_i32_0 : i32, i32
  }
  func.func @transform_9(%arg0: i32, %arg1: i32) -> (i32, i32) {
    %c0_i32 = arith.constant 0 : i32
    %c0_i32_0 = arith.constant 0 : i32
    %c0_i32_1 = arith.constant 0 : i32
    return %c0_i32, %c0_i32_0 : i32, i32
  }
  func.func @transform_10(%arg0: i32, %arg1: i32) -> (i32, i32) {
    %c0_i32 = arith.constant 0 : i32
    %c0_i32_0 = arith.constant 0 : i32
    %c0_i32_1 = arith.constant 0 : i32
    return %c0_i32, %c0_i32_0 : i32, i32
  }
  func.func @transform_11(%arg0: i32, %arg1: i32) -> (i32, i32) {
    %c0_i32 = arith.constant 0 : i32
    %c0_i32_0 = arith.constant 0 : i32
    %c0_i32_1 = arith.constant 0 : i32
    return %c0_i32, %c0_i32_0 : i32, i32
  }
  func.func @transform_12(%arg0: i32, %arg1: i32) -> (i32, i32) {
    %c0_i32 = arith.constant 0 : i32
    %c0_i32_0 = arith.constant 0 : i32
    %c0_i32_1 = arith.constant 0 : i32
    return %c0_i32, %c0_i32_0 : i32, i32
  }
  func.func @transform_13(%arg0: i32, %arg1: i32) -> (i32, i32, i32) {
    %c0_i32 = arith.constant 0 : i32
    %c0_i32_0 = arith.constant 0 : i32
    return %arg0, %arg1, %c0_i32 : i32, i32, i32
  }
}

</mosaic_0001>

<llo_original>
// kernel: tpu_custom_call.1
$region0: #{tpu_custom_call.1}
  #allocation0 [shape = 'u32[]', space=smem, size = 0x4, offset = 0x4, fixed_abs, tag = 'smem constant byte address 0x4 - core index']
  #allocation1 [shape = 'u32[72,128]{1,0:T(1,128)}', space=vmem, size = 0x9000, scoped, tag = 'internal scratch']
  #allocation2 [shape = 'f32[1,128]{1,0:T(1,128)}', space=vmem, size = 0x200, scoped, tag = 'scratch operand']
  #allocation3 [shape = 'f32[1,128]{1,0:T(1,128)}', space=vmem, size = 0x200, scoped, tag = 'scratch operand']
  #allocation4 [shape = 'bf16[256,128]{1,0:T(8,128)(2,1)}', space=vmem, size = 0x10000, scoped, tag = 'scratch operand']
  #allocation5 [shape = 'bf16[256,128]{1,0:T(8,128)(2,1)}', space=vmem, size = 0x10000, scoped, tag = 'scratch operand']
  %s0 = inlined_call_operand.hbm [shape: f32[2,256,128], index: 0, kind: input, shape index: {}]
  %s1 = inlined_call_operand.hbm [shape: f32[2,256,128], index: 1, kind: input, shape index: {}]
  %s2 = inlined_call_operand.vmem [shape: f32[1,128], index: 2, kind: input, shape index: {}]
  %s3 = inlined_call_operand.vmem [shape: f32[1,128], index: 3, kind: input, shape index: {}]
  %s4 = inlined_call_operand.hbm [shape: f32[128,128], index: 4, kind: input, shape index: {}]
  %s5 = inlined_call_operand.hbm [shape: bf16[128,128], index: 5, kind: input, shape index: {}]
  %s6 = inlined_call_operand.vmem [shape: f32[1,128], index: 6, kind: input, shape index: {}]
  %s7 = inlined_call_operand.hbm [shape: bf16[128,128], index: 7, kind: input, shape index: {}]
  %s8 = inlined_call_operand.vmem [shape: f32[1,128], index: 8, kind: input, shape index: {}]
  %s9 = inlined_call_operand.hbm [shape: bf16[128,128], index: 9, kind: input, shape index: {}]
  %s10 = inlined_call_operand.vmem [shape: f32[1,128], index: 10, kind: input, shape index: {}]
  %s11 = inlined_call_operand.hbm [shape: bf16[128,128], index: 11, kind: input, shape index: {}]
  %s12 = inlined_call_operand.vmem [shape: f32[1,128], index: 12, kind: input, shape index: {}]
  %s13 = inlined_call_operand.hbm [shape: f32[2,256,128], index: 13, kind: output, shape index: {}]
  %s14 = sld [smem:[#allocation0]]
  $region117: #{tpu_custom_call.1} parent=0
    _
  %s16 = ssub.s32 1, %s14
  %s17 = scalar_select 0, %s16, %s14
  $region1: #{tpu_custom_call.1} parent=0
    #allocation6 [shape = 'u8[262144]{0}', space=vmem, size = 0x40000, scoped, tag = 'input window, operand 0']
    #allocation7 [shape = 's32[2]{0}', space=sflag, size = 0x8, scoped, tag = 'scoped memory for tpu_custom_call.1']
    #allocation8 [shape = 's32[2]{0}', space=sflag, size = 0x8, scoped, tag = 'scoped memory for tpu_custom_call.1']
    #allocation9 [shape = 'u8[131072]{0}', space=vmem, size = 0x20000, scoped, tag = 'input window, operand 1']
    #allocation10 [shape = 's32[2]{0}', space=sflag, size = 0x8, scoped, tag = 'scoped memory for tpu_custom_call.1']
    #allocation11 [shape = 'u8[65536]{0}', space=vmem, size = 0x10000, scoped, tag = 'input window, operand 4, single buffered']
    #allocation12 [shape = 'u8[32768]{0}', space=vmem, size = 0x8000, scoped, tag = 'input window, operand 5, single buffered']
    #allocation13 [shape = 's32[1]{0}', space=sflag, size = 0x4, scoped, tag = 'scoped memory for tpu_custom_call.1']
    #allocation14 [shape = 'u8[32768]{0}', space=vmem, size = 0x8000, scoped, tag = 'input window, operand 7, single buffered']
    #allocation15 [shape = 'u8[32768]{0}', space=vmem, size = 0x8000, scoped, tag = 'input window, operand 9, single buffered']
    #allocation16 [shape = 's32[1]{0}', space=sflag, size = 0x4, scoped, tag = 'scoped memory for tpu_custom_call.1']
    #allocation17 [shape = 'u8[32768]{0}', space=vmem, size = 0x8000, scoped, tag = 'input window, operand 11, single buffered']
    #allocation18 [shape = 'u8[131072]{0}', space=vmem, size = 0x20000, scoped, tag = 'output window, operand 0']
    %18 = vsyncpa [#allocation7], 0
    %s19 = scalar_lea.sflag [#allocation7], 1
    %20 = vsyncpa %s19, 0
    %21 = vsyncpa [#allocation10], 0
    %s22 = scalar_lea.sflag [#allocation10], 1
    %23 = vsyncpa %s22, 0
    %24 = vsyncpa [#allocation13], 0
    %25 = vsyncpa [#allocation16], 0
    %26 = vsyncpa [#allocation8], 0
    %s27 = scalar_lea.sflag [#allocation8], 1
    %28 = vsyncpa %s27, 0
    loop: start=0, step=1, limit=6
    $region2: #{tpu_custom_call.1} parent=1 // loop_pre_header
      _
    $region3: #{tpu_custom_call.1} parent=1 // loop_header
      %s30 = sphi 0, %s34
      %p31 = scmp.ge.s32.totalorder %s30, 6
      %s37 = sphi 0, %s49
      %s38 = sphi 0, %s45
      %s39 = sphi 0, %s37
      %s40 = sphi 0, %s38
      %s41 = sphi 0, %s39
      %s42 = sphi 0, %s40
      %s52 = sphi 0, %s54
      %s55 = sphi 0, %s52
      %s56 = sphi 0, %s55
      %s72 = sphi 0, %s56
      %s80 = sphi 0, %s82
      %s83 = sphi 0, %s80
      %s84 = sphi 0, %s83
      %s100 = sphi 0, %s84
      %s104 = sphi 0, %s104
      %s106 = sphi 0, %s104
      %s107 = sphi 0, %s106
      %s121 = sphi 0, %s107
      %s125 = sphi 0, %s125
      %s127 = sphi 0, %s125
      %s128 = sphi 0, %s127
      %s142 = sphi 0, %s128
      %s146 = sphi 0, %s146
      %s148 = sphi 0, %s146
      %s149 = sphi 0, %s148
      %s163 = sphi 0, %s149
      %s167 = sphi 0, %s167
      %s169 = sphi 0, %s167
      %s170 = sphi 0, %s169
      %s184 = sphi 0, %s170
      %s188 = sphi 0, %s188
      %s190 = sphi 0, %s188
      %s191 = sphi 0, %s190
      %s205 = sphi 0, %s191
      %s209 = sphi 0, %s209
      %s211 = sphi 0, %s209
      %s212 = sphi 0, %s211
      %s226 = sphi 0, %s212
      %s230 = sphi 0, %s230
      %s232 = sphi 0, %s230
      %s233 = sphi 0, %s232
      %s247 = sphi 0, %s233
      %s251 = sphi 0, %s251
      %s253 = sphi 0, %s251
      %s254 = sphi 0, %s253
      %s268 = sphi 0, %s254
      %s272 = sphi 0, %s272
      %s274 = sphi 0, %s272
      %s275 = sphi 0, %s274
      %s289 = sphi 0, %s275
      %s293 = sphi 0, %s293
      %s295 = sphi 0, %s293
      %s296 = sphi 0, %s295
      %s310 = sphi 0, %s296
      %s314 = sphi 0, %s314
      %s316 = sphi 0, %s314
      %s317 = sphi 0, %s316
      %s331 = sphi 0, %s317
      %s339 = sphi 0, %s341
      %s342 = sphi 0, %s339
      %s343 = sphi 0, %s342
      %s359 = sphi 0, %s343
    $region4: #{tpu_custom_call.1} parent=1 // loop_header_branch
      %33 = sbr.rel (%p31) target = $region8
    $region5: #{tpu_custom_call.1} parent=1 // loop_body
      %s35 = ssub.s32 %s30, 1
      %s36 = ssub.s32 %s30, 2
      %s43 = sadd.s32 1, %s38
      %p44 = scmp.ge.s32.totalorder %s43, 2
      %s45 = scalar_select %p44, 0, %s43
      %s46 = sadd.s32 1, %s37
      %s47 = scalar_select %p44, %s46, %s37
      %p48 = scmp.ge.s32.totalorder %s47, 2
      %s49 = scalar_select %p48, 0, %s47
      %s50 = ssub.s32 %s37, %s49
      %p51 = scmp.eq.s32.totalorder %s50, 0
      %s53 = sadd.s32 %s52, 1
      %s54 = scalar_select %p51, %s52, %s53
      %p57 = pneg %p51
      %p58 = scmp.eq.s32.totalorder %s30, 3
      %p59 = por %p57, %p58
      %p60 = scmp.ne.s32.totalorder %s52, %s55
      %p61 = scmp.eq.s32.totalorder %s30, 0
      %p62 = por %p60, %p61
      %p63 = scmp.ne.s32.totalorder %s52, %s55
      %p64 = scmp.eq.s32.totalorder %s35, 3
      %p65 = por %p63, %p64
      %p66 = scmp.ne.s32.totalorder %s55, %s56
      %p67 = scmp.eq.s32.totalorder %s35, 0
      %p68 = por %p66, %p67
      %p69 = scmp.ne.s32.totalorder %s55, %s56
      %p70 = scmp.eq.s32.totalorder %s36, 3
      %p71 = por %p69, %p70
      %p73 = scmp.ne.s32.totalorder %s56, %s72
      %p74 = scmp.eq.s32.totalorder %s36, 0
      %p75 = por %p73, %p74
      %s76 = ssub.s32 %s37, %s49
      %s77 = ssub.s32 %s38, %s45
      %s78 = sor.u32 %s76, %s77
      %p79 = scmp.eq.s32.totalorder %s78, 0
      %s81 = sadd.s32 %s80, 1
      %s82 = scalar_select %p79, %s80, %s81
      %p85 = pneg %p79
      %p86 = scmp.eq.s32.totalorder %s30, 3
      %p87 = por %p85, %p86
      %p88 = scmp.ne.s32.totalorder %s80, %s83
      %p89 = scmp.eq.s32.totalorder %s30, 0
      %p90 = por %p88, %p89
      %p91 = scmp.ne.s32.totalorder %s80, %s83
      %p92 = scmp.eq.s32.totalorder %s35, 3
      %p93 = por %p91, %p92
      %p94 = scmp.ne.s32.totalorder %s83, %s84
      %p95 = scmp.eq.s32.totalorder %s35, 0
      %p96 = por %p94, %p95
      %p97 = scmp.ne.s32.totalorder %s83, %s84
      %p98 = scmp.eq.s32.totalorder %s36, 3
      %p99 = por %p97, %p98
      %p101 = scmp.ne.s32.totalorder %s84, %s100
      %p102 = scmp.eq.s32.totalorder %s36, 0
      %p103 = por %p101, %p102
      %s105 = sadd.s32 %s104, 1
      %p108 = scmp.eq.s32.totalorder %s30, 3
      %p109 = scmp.ne.s32.totalorder %s104, %s106
      %p110 = scmp.eq.s32.totalorder %s30, 0
      %p111 = por %p109, %p110
      %p112 = scmp.ne.s32.totalorder %s104, %s106
      %p113 = scmp.eq.s32.totalorder %s35, 3
      %p114 = por %p112, %p113
      %p115 = scmp.ne.s32.totalorder %s106, %s107
      %p116 = scmp.eq.s32.totalorder %s35, 0
      %p117 = por %p115, %p116
      %p118 = scmp.ne.s32.totalorder %s106, %s107
      %p119 = scmp.eq.s32.totalorder %s36, 3
      %p120 = por %p118, %p119
      %p122 = scmp.ne.s32.totalorder %s107, %s121
      %p123 = scmp.eq.s32.totalorder %s36, 0
      %p124 = por %p122, %p123
      %s126 = sadd.s32 %s125, 1
      %p129 = scmp.eq.s32.totalorder %s30, 3
      %p130 = scmp.ne.s32.totalorder %s125, %s127
      %p131 = scmp.eq.s32.totalorder %s30, 0
      %p132 = por %p130, %p131
      %p133 = scmp.ne.s32.totalorder %s125, %s127
      %p134 = scmp.eq.s32.totalorder %s35, 3
      %p135 = por %p133, %p134
      %p136 = scmp.ne.s32.totalorder %s127, %s128
      %p137 = scmp.eq.s32.totalorder %s35, 0
      %p138 = por %p136, %p137
      %p139 = scmp.ne.s32.totalorder %s127, %s128
      %p140 = scmp.eq.s32.totalorder %s36, 3
      %p141 = por %p139, %p140
      %p143 = scmp.ne.s32.totalorder %s128, %s142
      %p144 = scmp.eq.s32.totalorder %s36, 0
      %p145 = por %p143, %p144
      %s147 = sadd.s32 %s146, 1
      %p150 = scmp.eq.s32.totalorder %s30, 3
      %p151 = scmp.ne.s32.totalorder %s146, %s148
      %p152 = scmp.eq.s32.totalorder %s30, 0
      %p153 = por %p151, %p152
      %p154 = scmp.ne.s32.totalorder %s146, %s148
      %p155 = scmp.eq.s32.totalorder %s35, 3
      %p156 = por %p154, %p155
      %p157 = scmp.ne.s32.totalorder %s148, %s149
      %p158 = scmp.eq.s32.totalorder %s35, 0
      %p159 = por %p157, %p158
      %p160 = scmp.ne.s32.totalorder %s148, %s149
      %p161 = scmp.eq.s32.totalorder %s36, 3
      %p162 = por %p160, %p161
      %p164 = scmp.ne.s32.totalorder %s149, %s163
      %p165 = scmp.eq.s32.totalorder %s36, 0
      %p166 = por %p164, %p165
      %s168 = sadd.s32 %s167, 1
      %p171 = scmp.eq.s32.totalorder %s30, 3
      %p172 = scmp.ne.s32.totalorder %s167, %s169
      %p173 = scmp.eq.s32.totalorder %s30, 0
      %p174 = por %p172, %p173
      %p175 = scmp.ne.s32.totalorder %s167, %s169
      %p176 = scmp.eq.s32.totalorder %s35, 3
      %p177 = por %p175, %p176
      %p178 = scmp.ne.s32.totalorder %s169, %s170
      %p179 = scmp.eq.s32.totalorder %s35, 0
      %p180 = por %p178, %p179
      %p181 = scmp.ne.s32.totalorder %s169, %s170
      %p182 = scmp.eq.s32.totalorder %s36, 3
      %p183 = por %p181, %p182
      %p185 = scmp.ne.s32.totalorder %s170, %s184
      %p186 = scmp.eq.s32.totalorder %s36, 0
      %p187 = por %p185, %p186
      %s189 = sadd.s32 %s188, 1
      %p192 = scmp.eq.s32.totalorder %s30, 3
      %p193 = scmp.ne.s32.totalorder %s188, %s190
      %p194 = scmp.eq.s32.totalorder %s30, 0
      %p195 = por %p193, %p194
      %p196 = scmp.ne.s32.totalorder %s188, %s190
      %p197 = scmp.eq.s32.totalorder %s35, 3
      %p198 = por %p196, %p197
      %p199 = scmp.ne.s32.totalorder %s190, %s191
      %p200 = scmp.eq.s32.totalorder %s35, 0
      %p201 = por %p199, %p200
      %p202 = scmp.ne.s32.totalorder %s190, %s191
      %p203 = scmp.eq.s32.totalorder %s36, 3
      %p204 = por %p202, %p203
      %p206 = scmp.ne.s32.totalorder %s191, %s205
      %p207 = scmp.eq.s32.totalorder %s36, 0
      %p208 = por %p206, %p207
      %s210 = sadd.s32 %s209, 1
      %p213 = scmp.eq.s32.totalorder %s30, 3
      %p214 = scmp.ne.s32.totalorder %s209, %s211
      %p215 = scmp.eq.s32.totalorder %s30, 0
      %p216 = por %p214, %p215
      %p217 = scmp.ne.s32.totalorder %s209, %s211
      %p218 = scmp.eq.s32.totalorder %s35, 3
      %p219 = por %p217, %p218
      %p220 = scmp.ne.s32.totalorder %s211, %s212
      %p221 = scmp.eq.s32.totalorder %s35, 0
      %p222 = por %p220, %p221
      %p223 = scmp.ne.s32.totalorder %s211, %s212
      %p224 = scmp.eq.s32.totalorder %s36, 3
      %p225 = por %p223, %p224
      %p227 = scmp.ne.s32.totalorder %s212, %s226
      %p228 = scmp.eq.s32.totalorder %s36, 0
      %p229 = por %p227, %p228
      %s231 = sadd.s32 %s230, 1
      %p234 = scmp.eq.s32.totalorder %s30, 3
      %p235 = scmp.ne.s32.totalorder %s230, %s232
      %p236 = scmp.eq.s32.totalorder %s30, 0
      %p237 = por %p235, %p236
      %p238 = scmp.ne.s32.totalorder %s230, %s232
      %p239 = scmp.eq.s32.totalorder %s35, 3
      %p240 = por %p238, %p239
      %p241 = scmp.ne.s32.totalorder %s232, %s233
      %p242 = scmp.eq.s32.totalorder %s35, 0
      %p243 = por %p241, %p242
      %p244 = scmp.ne.s32.totalorder %s232, %s233
      %p245 = scmp.eq.s32.totalorder %s36, 3
      %p246 = por %p244, %p245
      %p248 = scmp.ne.s32.totalorder %s233, %s247
      %p249 = scmp.eq.s32.totalorder %s36, 0
      %p250 = por %p248, %p249
      %s252 = sadd.s32 %s251, 1
      %p255 = scmp.eq.s32.totalorder %s30, 3
      %p256 = scmp.ne.s32.totalorder %s251, %s253
      %p257 = scmp.eq.s32.totalorder %s30, 0
      %p258 = por %p256, %p257
      %p259 = scmp.ne.s32.totalorder %s251, %s253
      %p260 = scmp.eq.s32.totalorder %s35, 3
      %p261 = por %p259, %p260
      %p262 = scmp.ne.s32.totalorder %s253, %s254
      %p263 = scmp.eq.s32.totalorder %s35, 0
      %p264 = por %p262, %p263
      %p265 = scmp.ne.s32.totalorder %s253, %s254
      %p266 = scmp.eq.s32.totalorder %s36, 3
      %p267 = por %p265, %p266
      %p269 = scmp.ne.s32.totalorder %s254, %s268
      %p270 = scmp.eq.s32.totalorder %s36, 0
      %p271 = por %p269, %p270
      %s273 = sadd.s32 %s272, 1
      %p276 = scmp.eq.s32.totalorder %s30, 3
      %p277 = scmp.ne.s32.totalorder %s272, %s274
      %p278 = scmp.eq.s32.totalorder %s30, 0
      %p279 = por %p277, %p278
      %p280 = scmp.ne.s32.totalorder %s272, %s274
      %p281 = scmp.eq.s32.totalorder %s35, 3
      %p282 = por %p280, %p281
      %p283 = scmp.ne.s32.totalorder %s274, %s275
      %p284 = scmp.eq.s32.totalorder %s35, 0
      %p285 = por %p283, %p284
      %p286 = scmp.ne.s32.totalorder %s274, %s275
      %p287 = scmp.eq.s32.totalorder %s36, 3
      %p288 = por %p286, %p287
      %p290 = scmp.ne.s32.totalorder %s275, %s289
      %p291 = scmp.eq.s32.totalorder %s36, 0
      %p292 = por %p290, %p291
      %s294 = sadd.s32 %s293, 1
      %p297 = scmp.eq.s32.totalorder %s30, 3
      %p298 = scmp.ne.s32.totalorder %s293, %s295
      %p299 = scmp.eq.s32.totalorder %s30, 0
      %p300 = por %p298, %p299
      %p301 = scmp.ne.s32.totalorder %s293, %s295
      %p302 = scmp.eq.s32.totalorder %s35, 3
      %p303 = por %p301, %p302
      %p304 = scmp.ne.s32.totalorder %s295, %s296
      %p305 = scmp.eq.s32.totalorder %s35, 0
      %p306 = por %p304, %p305
      %p307 = scmp.ne.s32.totalorder %s295, %s296
      %p308 = scmp.eq.s32.totalorder %s36, 3
      %p309 = por %p307, %p308
      %p311 = scmp.ne.s32.totalorder %s296, %s310
      %p312 = scmp.eq.s32.totalorder %s36, 0
      %p313 = por %p311, %p312
      %s315 = sadd.s32 %s314, 1
      %p318 = scmp.eq.s32.totalorder %s30, 3
      %p319 = scmp.ne.s32.totalorder %s314, %s316
      %p320 = scmp.eq.s32.totalorder %s30, 0
      %p321 = por %p319, %p320
      %p322 = scmp.ne.s32.totalorder %s314, %s316
      %p323 = scmp.eq.s32.totalorder %s35, 3
      %p324 = por %p322, %p323
      %p325 = scmp.ne.s32.totalorder %s316, %s317
      %p326 = scmp.eq.s32.totalorder %s35, 0
      %p327 = por %p325, %p326
      %p328 = scmp.ne.s32.totalorder %s316, %s317
      %p329 = scmp.eq.s32.totalorder %s36, 3
      %p330 = por %p328, %p329
      %p332 = scmp.ne.s32.totalorder %s317, %s331
      %p333 = scmp.eq.s32.totalorder %s36, 0
      %p334 = por %p332, %p333
      %s335 = ssub.s32 %s37, %s49
      %s336 = ssub.s32 %s38, %s45
      %s337 = sor.u32 %s335, %s336
      %p338 = scmp.eq.s32.totalorder %s337, 0
      %s340 = sadd.s32 %s339, 1
      %s341 = scalar_select %p338, %s339, %s340
      %p344 = pneg %p338
      %p345 = scmp.eq.s32.totalorder %s30, 3
      %p346 = por %p344, %p345
      %p347 = scmp.ne.s32.totalorder %s339, %s342
      %p348 = scmp.eq.s32.totalorder %s30, 0
      %p349 = por %p347, %p348
      %p350 = scmp.ne.s32.totalorder %s339, %s342
      %p351 = scmp.eq.s32.totalorder %s35, 3
      %p352 = por %p350, %p351
      %p353 = scmp.ne.s32.totalorder %s342, %s343
      %p354 = scmp.eq.s32.totalorder %s35, 0
      %p355 = por %p353, %p354
      %p356 = scmp.ne.s32.totalorder %s342, %s343
      %p357 = scmp.eq.s32.totalorder %s36, 3
      %p358 = por %p356, %p357
      %p360 = scmp.ne.s32.totalorder %s343, %s359
      %p361 = scmp.eq.s32.totalorder %s36, 0
      %p362 = por %p360, %p361
      %p363 = scmp.le.s32.totalorder 1, %s30
      %p364 = scmp.lt.s32.totalorder %s30, 5
      %p365 = pnand %p363, %p364
      %p366 = pneg %p365
      // Predicated region
      $region9: #{tpu_custom_call.1} parent=5 // pred_check
        _
      $region10: #{tpu_custom_call.1} parent=5 // pred_check_branch
        %368 = sbr.rel (%p365) target = $region12
      $region11: #{tpu_custom_call.1} parent=5 // pred_region
        %s369 = ssub.s32 %s30, 1
        // Predicated region
        $region13: #{tpu_custom_call.1} parent=11 // pred_check
          %p370 = pneg %p117
        $region14: #{tpu_custom_call.1} parent=11 // pred_check_branch
          %372 = sbr.rel (%p370) target = $region16
        $region15: #{tpu_custom_call.1} parent=11 // pred_region
          _
        $region16: #{tpu_custom_call.1} parent=11 // pred_fallthru
          _
        // Predicated region
        $region17: #{tpu_custom_call.1} parent=11 // pred_check
          %p373 = pneg %p138
        $region18: #{tpu_custom_call.1} parent=11 // pred_check_branch
          %375 = sbr.rel (%p373) target = $region20
        $region19: #{tpu_custom_call.1} parent=11 // pred_region
          _
        $region20: #{tpu_custom_call.1} parent=11 // pred_fallthru
          _
        // Predicated region
        $region21: #{tpu_custom_call.1} parent=11 // pred_check
          %p376 = pneg %p159
        $region22: #{tpu_custom_call.1} parent=11 // pred_check_branch
          %378 = sbr.rel (%p376) target = $region24
        $region23: #{tpu_custom_call.1} parent=11 // pred_region
          %380 = vsyncadd [#allocation10], 0
          %s381 = sshll.u32 %s4, 4
          %s382 = int_to_ptr.hbm [resolvable:$true] %s381
          %s383 = sshll.u32 [#allocation11], 4
          %s384 = int_to_ptr.vmem [resolvable:$true] %s383
          %389 = dma.hbm_to_vmem [thread:$0]  %s382, 2048, %s384, [#allocation10], 128, 128, 8
        $region24: #{tpu_custom_call.1} parent=11 // pred_fallthru
          _
        // Predicated region
        $region25: #{tpu_custom_call.1} parent=11 // pred_check
          %p390 = pneg %p180
        $region26: #{tpu_custom_call.1} parent=11 // pred_check_branch
          %392 = sbr.rel (%p390) target = $region28
        $region27: #{tpu_custom_call.1} parent=11 // pred_region
          %394 = vsyncadd [#allocation13], 0
          %s395 = sshll.u32 %s5, 4
          %s396 = int_to_ptr.hbm [resolvable:$true] %s395
          %s397 = sshll.u32 [#allocation12], 4
          %s398 = int_to_ptr.vmem [resolvable:$true] %s397
          %403 = dma.hbm_to_vmem [thread:$0]  %s396, 1024, %s398, [#allocation13], 64, 64, 4
        $region28: #{tpu_custom_call.1} parent=11 // pred_fallthru
          _
        // Predicated region
        $region29: #{tpu_custom_call.1} parent=11 // pred_check
          %p404 = pneg %p201
        $region30: #{tpu_custom_call.1} parent=11 // pred_check_branch
          %406 = sbr.rel (%p404) target = $region32
        $region31: #{tpu_custom_call.1} parent=11 // pred_region
          _
        $region32: #{tpu_custom_call.1} parent=11 // pred_fallthru
          _
        // Predicated region
        $region33: #{tpu_custom_call.1} parent=11 // pred_check
          %p407 = pneg %p222
        $region34: #{tpu_custom_call.1} parent=11 // pred_check_branch
          %409 = sbr.rel (%p407) target = $region36
        $region35: #{tpu_custom_call.1} parent=11 // pred_region
          %411 = vsyncadd [#allocation13], 0
          %s412 = sshll.u32 %s7, 4
          %s413 = int_to_ptr.hbm [resolvable:$true] %s412
          %s414 = sshll.u32 [#allocation14], 4
          %s415 = int_to_ptr.vmem [resolvable:$true] %s414
          %420 = dma.hbm_to_vmem [thread:$0]  %s413, 1024, %s415, [#allocation13], 64, 64, 4
        $region36: #{tpu_custom_call.1} parent=11 // pred_fallthru
          _
        // Predicated region
        $region37: #{tpu_custom_call.1} parent=11 // pred_check
          %p421 = pneg %p243
        $region38: #{tpu_custom_call.1} parent=11 // pred_check_branch
          %423 = sbr.rel (%p421) target = $region40
        $region39: #{tpu_custom_call.1} parent=11 // pred_region
          _
        $region40: #{tpu_custom_call.1} parent=11 // pred_fallthru
          _
        // Predicated region
        $region41: #{tpu_custom_call.1} parent=11 // pred_check
          %p424 = pneg %p264
        $region42: #{tpu_custom_call.1} parent=11 // pred_check_branch
          %426 = sbr.rel (%p424) target = $region44
        $region43: #{tpu_custom_call.1} parent=11 // pred_region
          %428 = vsyncadd [#allocation16], 0
          %s429 = sshll.u32 %s9, 4
          %s430 = int_to_ptr.hbm [resolvable:$true] %s429
          %s431 = sshll.u32 [#allocation15], 4
          %s432 = int_to_ptr.vmem [resolvable:$true] %s431
          %437 = dma.hbm_to_vmem [thread:$0]  %s430, 1024, %s432, [#allocation16], 64, 64, 4
        $region44: #{tpu_custom_call.1} parent=11 // pred_fallthru
          _
        // Predicated region
        $region45: #{tpu_custom_call.1} parent=11 // pred_check
          %p438 = pneg %p285
        $region46: #{tpu_custom_call.1} parent=11 // pred_check_branch
          %440 = sbr.rel (%p438) target = $region48
        $region47: #{tpu_custom_call.1} parent=11 // pred_region
          _
        $region48: #{tpu_custom_call.1} parent=11 // pred_fallthru
          _
        // Predicated region
        $region49: #{tpu_custom_call.1} parent=11 // pred_check
          %p441 = pneg %p306
        $region50: #{tpu_custom_call.1} parent=11 // pred_check_branch
          %443 = sbr.rel (%p441) target = $region52
        $region51: #{tpu_custom_call.1} parent=11 // pred_region
          %445 = vsyncadd [#allocation16], 0
          %s446 = sshll.u32 %s11, 4
          %s447 = int_to_ptr.hbm [resolvable:$true] %s446
          %s448 = sshll.u32 [#allocation17], 4
          %s449 = int_to_ptr.vmem [resolvable:$true] %s448
          %454 = dma.hbm_to_vmem [thread:$0]  %s447, 1024, %s449, [#allocation16], 64, 64, 4
        $region52: #{tpu_custom_call.1} parent=11 // pred_fallthru
          _
        // Predicated region
        $region53: #{tpu_custom_call.1} parent=11 // pred_check
          %p455 = pneg %p327
        $region54: #{tpu_custom_call.1} parent=11 // pred_check_branch
          %457 = sbr.rel (%p455) target = $region56
        $region55: #{tpu_custom_call.1} parent=11 // pred_region
          _
        $region56: #{tpu_custom_call.1} parent=11 // pred_fallthru
          _
      $region12: #{tpu_custom_call.1} parent=5 // pred_fallthru
        _
      %p458 = scmp.lt.s32.totalorder %s30, 4
      // Predicated region
      $region57: #{tpu_custom_call.1} parent=5 // pred_check
        %p459 = pneg %p458
      $region58: #{tpu_custom_call.1} parent=5 // pred_check_branch
        %461 = sbr.rel (%p459) target = $region60
      $region59: #{tpu_custom_call.1} parent=5 // pred_region
        // Predicated region
        $region61: #{tpu_custom_call.1} parent=59 // pred_check
          %p462 = pneg %p62
        $region62: #{tpu_custom_call.1} parent=59 // pred_check_branch
          %464 = sbr.rel (%p462) target = $region64
        $region63: #{tpu_custom_call.1} parent=59 // pred_region
          %s465 = sand.u32 %s52, 1
          %s466 = scalar_lea.sflag [#allocation7], %s465
          %s467 = sand.u32 %s52, 1
          %s468 = smul.addr %s467, 256
          %s469 = scalar_lea.vmem [#allocation6], %s468
          %471 = vsyncadd %s466, 0
          %s472 = smul.addr %s37, 32
          %s473 = smul.addr %s472, 8
          %s474 = scalar_lea.hbm %s0, %s473
          %s475 = sshll.u32 %s474, 4
          %s476 = int_to_ptr.hbm [resolvable:$true] %s475
          %s477 = sshll.u32 %s469, 4
          %s478 = int_to_ptr.vmem [resolvable:$true] %s477
          %483 = dma.hbm_to_vmem [thread:$0]  %s476, 4096, %s478, %s466, 128, 128, 8
        $region64: #{tpu_custom_call.1} parent=59 // pred_fallthru
          _
        // Predicated region
        $region65: #{tpu_custom_call.1} parent=59 // pred_check
          %p484 = pneg %p90
        $region66: #{tpu_custom_call.1} parent=59 // pred_check_branch
          %486 = sbr.rel (%p484) target = $region68
        $region67: #{tpu_custom_call.1} parent=59 // pred_region
          %s487 = sand.u32 %s30, 1
          %s488 = scalar_lea.sflag [#allocation10], %s487
          %s489 = sand.u32 %s80, 1
          %s490 = smul.addr %s489, 128
          %s491 = scalar_lea.vmem [#allocation9], %s490
          %s492 = smul.u32 16, %s38
          %494 = vsyncadd %s488, 0
          %s495 = smul.addr %s37, 32
          %s496 = sadd.s32 %s492, %s495
          %s497 = smul.addr %s496, 8
          %s498 = scalar_lea.hbm %s1, %s497
          %s499 = sshll.u32 %s498, 4
          %s500 = int_to_ptr.hbm [resolvable:$true] %s499
          %s501 = sshll.u32 %s491, 4
          %s502 = int_to_ptr.vmem [resolvable:$true] %s501
          %507 = dma.hbm_to_vmem [thread:$0]  %s500, 2048, %s502, %s488, 128, 128, 8
        $region68: #{tpu_custom_call.1} parent=59 // pred_fallthru
          _
      $region60: #{tpu_custom_call.1} parent=5 // pred_fallthru
        _
      %p508 = scmp.le.s32.totalorder 1, %s30
      %p509 = scmp.lt.s32.totalorder %s30, 5
      %p510 = pnand %p508, %p509
      %p511 = pneg %p510
      // Predicated region
      $region69: #{tpu_custom_call.1} parent=5 // pred_check
        _
      $region70: #{tpu_custom_call.1} parent=5 // pred_check_branch
        %513 = sbr.rel (%p510) target = $region72
      $region71: #{tpu_custom_call.1} parent=5 // pred_region
        %s514 = ssub.s32 %s30, 1
        %s515 = sand.u32 %s55, 1
        %s516 = scalar_lea.sflag [#allocation7], %s515
        %s517 = sand.u32 %s55, 1
        %s518 = smul.addr %s517, 256
        %s519 = scalar_lea.vmem [#allocation6], %s518
        // Predicated region
        $region73: #{tpu_custom_call.1} parent=71 // pred_check
          %p520 = pneg %p68
        $region74: #{tpu_custom_call.1} parent=71 // pred_check_branch
          %522 = sbr.rel (%p520) target = $region76
        $region75: #{tpu_custom_call.1} parent=71 // pred_region
          %524 = dma.done %s516, 4096
        $region76: #{tpu_custom_call.1} parent=71 // pred_fallthru
          _
        %s525 = sand.u32 %s35, 1
        %s526 = scalar_lea.sflag [#allocation10], %s525
        %s527 = sand.u32 %s83, 1
        %s528 = smul.addr %s527, 128
        %s529 = scalar_lea.vmem [#allocation9], %s528
        // Predicated region
        $region77: #{tpu_custom_call.1} parent=71 // pred_check
          %p530 = pneg %p96
        $region78: #{tpu_custom_call.1} parent=71 // pred_check_branch
          %532 = sbr.rel (%p530) target = $region80
        $region79: #{tpu_custom_call.1} parent=71 // pred_region
          %534 = dma.done %s526, 2048
        $region80: #{tpu_custom_call.1} parent=71 // pred_fallthru
          _
        // Predicated region
        $region81: #{tpu_custom_call.1} parent=71 // pred_check
          %p535 = pneg %p159
        $region82: #{tpu_custom_call.1} parent=71 // pred_check_branch
          %537 = sbr.rel (%p535) target = $region84
        $region83: #{tpu_custom_call.1} parent=71 // pred_region
          %539 = dma.done [#allocation10], 2048
        $region84: #{tpu_custom_call.1} parent=71 // pred_fallthru
          _
        // Predicated region
        $region85: #{tpu_custom_call.1} parent=71 // pred_check
          %p540 = pneg %p180
        $region86: #{tpu_custom_call.1} parent=71 // pred_check_branch
          %542 = sbr.rel (%p540) target = $region88
        $region87: #{tpu_custom_call.1} parent=71 // pred_region
          %544 = dma.done [#allocation13], 1024
        $region88: #{tpu_custom_call.1} parent=71 // pred_fallthru
          _
        // Predicated region
        $region89: #{tpu_custom_call.1} parent=71 // pred_check
          %p545 = pneg %p222
        $region90: #{tpu_custom_call.1} parent=71 // pred_check_branch
          %547 = sbr.rel (%p545) target = $region92
        $region91: #{tpu_custom_call.1} parent=71 // pred_region
          %549 = dma.done [#allocation13], 1024
        $region92: #{tpu_custom_call.1} parent=71 // pred_fallthru
          _
        // Predicated region
        $region93: #{tpu_custom_call.1} parent=71 // pred_check
          %p550 = pneg %p264
        $region94: #{tpu_custom_call.1} parent=71 // pred_check_branch
          %552 = sbr.rel (%p550) target = $region96
        $region95: #{tpu_custom_call.1} parent=71 // pred_region
          %554 = dma.done [#allocation16], 1024
        $region96: #{tpu_custom_call.1} parent=71 // pred_fallthru
          _
        // Predicated region
        $region97: #{tpu_custom_call.1} parent=71 // pred_check
          %p555 = pneg %p306
        $region98: #{tpu_custom_call.1} parent=71 // pred_check_branch
          %557 = sbr.rel (%p555) target = $region100
        $region99: #{tpu_custom_call.1} parent=71 // pred_region
          %559 = dma.done [#allocation16], 1024
        $region100: #{tpu_custom_call.1} parent=71 // pred_fallthru
          _
        %s560 = sand.u32 %s55, 1
        %s561 = scalar_lea.sflag [#allocation7], %s560
        %s562 = sand.u32 %s55, 1
        %s563 = smul.addr %s562, 256
        %s564 = scalar_lea.vmem [#allocation6], %s563
        %p565 = pneg %p68
        %p566 = pneg %p65
        %s567 = sand.u32 %s35, 1
        %s568 = scalar_lea.sflag [#allocation10], %s567
        %s569 = sand.u32 %s83, 1
        %s570 = smul.addr %s569, 128
        %s571 = scalar_lea.vmem [#allocation9], %s570
        %p572 = pneg %p96
        %p573 = pneg %p93
        %p574 = pneg %p117
        %p575 = pneg %p114
        %p576 = pneg %p138
        %p577 = pneg %p135
        %p578 = pneg %p159
        %p579 = pneg %p156
        %p580 = pneg %p180
        %p581 = pneg %p177
        %p582 = pneg %p201
        %p583 = pneg %p198
        %p584 = pneg %p222
        %p585 = pneg %p219
        %p586 = pneg %p243
        %p587 = pneg %p240
        %p588 = pneg %p264
        %p589 = pneg %p261
        %p590 = pneg %p285
        %p591 = pneg %p282
        %p592 = pneg %p306
        %p593 = pneg %p303
        %p594 = pneg %p327
        %p595 = pneg %p324
        %p596 = pneg %p355
        %p597 = pneg %p352
        %s598 = sand.u32 %s342, 1
        %s599 = scalar_lea.sflag [#allocation8], %s598
        %s600 = sand.u32 %s342, 1
        %s601 = smul.addr %s600, 128
        %s602 = scalar_lea.vmem [#allocation18], %s601
        %s603 = smul.u32 16, %s40
        %s604 = smul.u32 16, %s40
        %p605 = scmp.eq.s32.totalorder %s40, 0
        // Predicated region
        $region101: #{tpu_custom_call.1} parent=71 // pred_check
          %p606 = pneg %p605
        $region102: #{tpu_custom_call.1} parent=71 // pred_check_branch
          %608 = sbr.rel (%p606) target = $region104
        $region103: #{tpu_custom_call.1} parent=71 // pred_region
          %v609 = vld [vmem:[%s519] sm:$0xff]
          %v610 = vld [vmem:[%s519 + $0x8] sm:$0xff]
          %v611 = vld [vmem:[%s519 + $0x10] sm:$0xff]
          %v612 = vld [vmem:[%s519 + $0x18] sm:$0xff]
          %v613 = vld [vmem:[%s519 + $0x20] sm:$0xff]
          %v614 = vld [vmem:[%s519 + $0x28] sm:$0xff]
          %v615 = vld [vmem:[%s519 + $0x30] sm:$0xff]
          %v616 = vld [vmem:[%s519 + $0x38] sm:$0xff]
          %v617 = vld [vmem:[%s519 + $0x40] sm:$0xff]
          %v618 = vld [vmem:[%s519 + $0x48] sm:$0xff]
          %v619 = vld [vmem:[%s519 + $0x50] sm:$0xff]
          %v620 = vld [vmem:[%s519 + $0x58] sm:$0xff]
          %v621 = vld [vmem:[%s519 + $0x60] sm:$0xff]
          %v622 = vld [vmem:[%s519 + $0x68] sm:$0xff]
          %v623 = vld [vmem:[%s519 + $0x70] sm:$0xff]
          %v624 = vld [vmem:[%s519 + $0x78] sm:$0xff]
          %v625 = vld [vmem:[%s519 + $0x80] sm:$0xff]
          %v626 = vld [vmem:[%s519 + $0x88] sm:$0xff]
          %v627 = vld [vmem:[%s519 + $0x90] sm:$0xff]
          %v628 = vld [vmem:[%s519 + $0x98] sm:$0xff]
          %v629 = vld [vmem:[%s519 + $0xa0] sm:$0xff]
          %v630 = vld [vmem:[%s519 + $0xa8] sm:$0xff]
          %v631 = vld [vmem:[%s519 + $0xb0] sm:$0xff]
          %v632 = vld [vmem:[%s519 + $0xb8] sm:$0xff]
          %v633 = vld [vmem:[%s519 + $0xc0] sm:$0xff]
          %v634 = vld [vmem:[%s519 + $0xc8] sm:$0xff]
          %v635 = vld [vmem:[%s519 + $0xd0] sm:$0xff]
          %v636 = vld [vmem:[%s519 + $0xd8] sm:$0xff]
          %v637 = vld [vmem:[%s519 + $0xe0] sm:$0xff]
          %v638 = vld [vmem:[%s519 + $0xe8] sm:$0xff]
          %v639 = vld [vmem:[%s519 + $0xf0] sm:$0xff]
          %v640 = vld [vmem:[%s519 + $0xf8] sm:$0xff]
          %v641 = vadd.f32 %v609, %v610
          %v642 = vadd.f32 %v641, %v611
          %v643 = vadd.f32 %v642, %v612
          %v644 = vadd.f32 %v643, %v613
          %v645 = vadd.f32 %v644, %v614
          %v646 = vadd.f32 %v645, %v615
          %v647 = vadd.f32 %v646, %v616
          %v648 = vadd.f32 %v647, %v617
          %v649 = vadd.f32 %v648, %v618
          %v650 = vadd.f32 %v649, %v619
          %v651 = vadd.f32 %v650, %v620
          %v652 = vadd.f32 %v651, %v621
          %v653 = vadd.f32 %v652, %v622
          %v654 = vadd.f32 %v653, %v623
          %v655 = vadd.f32 %v654, %v624
          %v656 = vadd.f32 %v655, %v625
          %v657 = vadd.f32 %v656, %v626
          %v658 = vadd.f32 %v657, %v627
          %v659 = vadd.f32 %v658, %v628
          %v660 = vadd.f32 %v659, %v629
          %v661 = vadd.f32 %v660, %v630
          %v662 = vadd.f32 %v661, %v631
          %v663 = vadd.f32 %v662, %v632
          %v664 = vadd.f32 %v663, %v633
          %v665 = vadd.f32 %v664, %v634
          %v666 = vadd.f32 %v665, %v635
          %v667 = vadd.f32 %v666, %v636
          %v668 = vadd.f32 %v667, %v637
          %v669 = vadd.f32 %v668, %v638
          %v670 = vadd.f32 %v669, %v639
          %v671 = vadd.f32 %v670, %v640
          %v672 = vrot.slane %v671, 4
          %v673 = vadd.f32 %v671, %v672
          %v674 = vrot.slane %v673, 2
          %v675 = vadd.f32 %v673, %v674
          %v676 = vrot.slane %v675, 1
          %v677 = vadd.f32 %v675, %v676
          %v678 = vmul.f32 %v609, %v609
          %v679 = vmul.f32 %v610, %v610
          %v680 = vmul.f32 %v611, %v611
          %v681 = vmul.f32 %v612, %v612
          %v682 = vmul.f32 %v613, %v613
          %v683 = vmul.f32 %v614, %v614
          %v684 = vmul.f32 %v615, %v615
          %v685 = vmul.f32 %v616, %v616
          %v686 = vmul.f32 %v617, %v617
          %v687 = vmul.f32 %v618, %v618
          %v688 = vmul.f32 %v619, %v619
          %v689 = vmul.f32 %v620, %v620
          %v690 = vmul.f32 %v621, %v621
          %v691 = vmul.f32 %v622, %v622
          %v692 = vmul.f32 %v623, %v623
          %v693 = vmul.f32 %v624, %v624
          %v694 = vmul.f32 %v625, %v625
          %v695 = vmul.f32 %v626, %v626
          %v696 = vmul.f32 %v627, %v627
          %v697 = vmul.f32 %v628, %v628
          %v698 = vmul.f32 %v629, %v629
          %v699 = vmul.f32 %v630, %v630
          %v700 = vmul.f32 %v631, %v631
          %v701 = vmul.f32 %v632, %v632
          %v702 = vmul.f32 %v633, %v633
          %v703 = vmul.f32 %v634, %v634
          %v704 = vmul.f32 %v635, %v635
          %v705 = vmul.f32 %v636, %v636
          %v706 = vmul.f32 %v637, %v637
          %v707 = vmul.f32 %v638, %v638
          %v708 = vmul.f32 %v639, %v639
          %v709 = vmul.f32 %v640, %v640
          %v710 = vadd.f32 %v678, %v679
          %v711 = vadd.f32 %v710, %v680
          %v712 = vadd.f32 %v711, %v681
          %v713 = vadd.f32 %v712, %v682
          %v714 = vadd.f32 %v713, %v683
          %v715 = vadd.f32 %v714, %v684
          %v716 = vadd.f32 %v715, %v685
          %v717 = vadd.f32 %v716, %v686
          %v718 = vadd.f32 %v717, %v687
          %v719 = vadd.f32 %v718, %v688
          %v720 = vadd.f32 %v719, %v689
          %v721 = vadd.f32 %v720, %v690
          %v722 = vadd.f32 %v721, %v691
          %v723 = vadd.f32 %v722, %v692
          %v724 = vadd.f32 %v723, %v693
          %v725 = vadd.f32 %v724, %v694
          %v726 = vadd.f32 %v725, %v695
          %v727 = vadd.f32 %v726, %v696
          %v728 = vadd.f32 %v727, %v697
          %v729 = vadd.f32 %v728, %v698
          %v730 = vadd.f32 %v729, %v699
          %v731 = vadd.f32 %v730, %v700
          %v732 = vadd.f32 %v731, %v701
          %v733 = vadd.f32 %v732, %v702
          %v734 = vadd.f32 %v733, %v703
          %v735 = vadd.f32 %v734, %v704
          %v736 = vadd.f32 %v735, %v705
          %v737 = vadd.f32 %v736, %v706
          %v738 = vadd.f32 %v737, %v707
          %v739 = vadd.f32 %v738, %v708
          %v740 = vadd.f32 %v739, %v709
          %v741 = vrot.slane %v740, 4
          %v742 = vadd.f32 %v740, %v741
          %v743 = vrot.slane %v742, 2
          %v744 = vadd.f32 %v742, %v743
          %v745 = vrot.slane %v744, 1
          %v746 = vadd.f32 %v744, %v745
          %v747 = vld [vmem:[#allocation11] sm:$0xff]
          %v748 = vld [vmem:[#allocation11 + $0x8] sm:$0xff]
          %v749 = vld [vmem:[#allocation11 + $0x10] sm:$0xff]
          %v750 = vld [vmem:[#allocation11 + $0x18] sm:$0xff]
          %v751 = vld [vmem:[#allocation11 + $0x20] sm:$0xff]
          %v752 = vld [vmem:[#allocation11 + $0x28] sm:$0xff]
          %v753 = vld [vmem:[#allocation11 + $0x30] sm:$0xff]
          %v754 = vld [vmem:[#allocation11 + $0x38] sm:$0xff]
          %v755 = vld [vmem:[#allocation11 + $0x40] sm:$0xff]
          %v756 = vld [vmem:[#allocation11 + $0x48] sm:$0xff]
          %v757 = vld [vmem:[#allocation11 + $0x50] sm:$0xff]
          %v758 = vld [vmem:[#allocation11 + $0x58] sm:$0xff]
          %v759 = vld [vmem:[#allocation11 + $0x60] sm:$0xff]
          %v760 = vld [vmem:[#allocation11 + $0x68] sm:$0xff]
          %v761 = vld [vmem:[#allocation11 + $0x70] sm:$0xff]
          %v762 = vld [vmem:[#allocation11 + $0x78] sm:$0xff]
          %763 = vmatpush.msra.mxu0 %v762
          %764 = vmatpush.msra.mxu0 %v761
          %765 = vmatpush.msra.mxu0 %v760
          %766 = vmatpush.msra.mxu0 %v759
          %767 = vmatpush.msra.mxu0 %v758
          %768 = vmatpush.msra.mxu0 %v757
          %769 = vmatpush.msra.mxu0 %v756
          %770 = vmatpush.msra.mxu0 %v755
          %771 = vmatpush.msra.mxu0 %v754
          %772 = vmatpush.msra.mxu0 %v753
          %773 = vmatpush.msra.mxu0 %v752
          %774 = vmatpush.msra.mxu0 %v751
          %775 = vmatpush.msra.mxu0 %v750
          %776 = vmatpush.msra.mxu0 %v749
          %777 = vmatpush.msra.mxu0 %v748
          %778 = vmatpush.msra.mxu0 %v747
          %779 = vmatmul.f32.gmra.mxu0 %v677
          %v780 = vpop.f32.mrf.mxu0
          %v781 = vadd.f32 0.0, %v780
          %782 = vdwg.mxu0
          %783 = vmatpush.msra.mxu0 %v762
          %784 = vmatpush.msra.mxu0 %v761
          %785 = vmatpush.msra.mxu0 %v760
          %786 = vmatpush.msra.mxu0 %v759
          %787 = vmatpush.msra.mxu0 %v758
          %788 = vmatpush.msra.mxu0 %v757
          %789 = vmatpush.msra.mxu0 %v756
          %790 = vmatpush.msra.mxu0 %v755
          %791 = vmatpush.msra.mxu0 %v754
          %792 = vmatpush.msra.mxu0 %v753
          %793 = vmatpush.msra.mxu0 %v752
          %794 = vmatpush.msra.mxu0 %v751
          %795 = vmatpush.msra.mxu0 %v750
          %796 = vmatpush.msra.mxu0 %v749
          %797 = vmatpush.msra.mxu0 %v748
          %798 = vmatpush.msra.mxu0 %v747
          %799 = vmatmul.f32.gmra.mxu0 %v746
          %v800 = vpop.f32.mrf.mxu0
          %v801 = vadd.f32 0.0, %v800
          %802 = vdwg.mxu0
          %v803 = vmul.f32 %v781, %v781
          %v804 = vsub.f32 %v801, %v803
          %v805 = vmax.f32 %v804, 0.0
          %v806 = vadd.f32 %v805, 1e-06
          %v807 = vrsqrt.pop %v806
          %v808 = vmul.f32 %v807, %v806
          %v809 = vmul.f32 %v808, %v807
          %v810 = vmul.f32 0.5, %v809
          %v811 = vsub.f32 1.5, %v810
          %v812 = vmul.f32 %v807, %v811
          %vm813 = vweird.f32 %v806
          %vm814 = vweird.f32 %v807
          %vm815 = vmor %vm813, %vm814
          %v816 = vsel %vm815, %v807, %v812
          %v817 = vld [vmem:[%s2] sm:$0x1]
          %v818 = vmul.f32 %v816, %v817
          %v819 = vld [vmem:[%s3] sm:$0x1]
          %v820 = vmul.f32 %v781, %v818
          %v821 = vsub.f32 %v819, %v820
          %822 = vst [vmem:[#allocation2] sm:$0x1] %v818
          %823 = vst [vmem:[#allocation3] sm:$0x1] %v821
          %v824 = vperm.slane %v818, 0
          %v825 = vmul.f32 %v609, %v824
          %v826 = vmul.f32 %v610, %v824
          %v827 = vmul.f32 %v611, %v824
          %v828 = vmul.f32 %v612, %v824
          %v829 = vmul.f32 %v613, %v824
          %v830 = vmul.f32 %v614, %v824
          %v831 = vmul.f32 %v615, %v824
          %v832 = vmul.f32 %v616, %v824
          %v833 = vmul.f32 %v617, %v824
          %v834 = vmul.f32 %v618, %v824
          %v835 = vmul.f32 %v619, %v824
          %v836 = vmul.f32 %v620, %v824
          %v837 = vmul.f32 %v621, %v824
          %v838 = vmul.f32 %v622, %v824
          %v839 = vmul.f32 %v623, %v824
          %v840 = vmul.f32 %v624, %v824
          %v841 = vmul.f32 %v625, %v824
          %v842 = vmul.f32 %v626, %v824
          %v843 = vmul.f32 %v627, %v824
          %v844 = vmul.f32 %v628, %v824
          %v845 = vmul.f32 %v629, %v824
          %v846 = vmul.f32 %v630, %v824
          %v847 = vmul.f32 %v631, %v824
          %v848 = vmul.f32 %v632, %v824
          %v849 = vmul.f32 %v633, %v824
          %v850 = vmul.f32 %v634, %v824
          %v851 = vmul.f32 %v635, %v824
          %v852 = vmul.f32 %v636, %v824
          %v853 = vmul.f32 %v637, %v824
          %v854 = vmul.f32 %v638, %v824
          %v855 = vmul.f32 %v639, %v824
          %v856 = vmul.f32 %v640, %v824
          %v858 = vperm.slane %v821, 0
          %v860 = vadd.f32 %v825, %v858
          %v861 = vadd.f32 %v826, %v858
          %v862 = vadd.f32 %v827, %v858
          %v863 = vadd.f32 %v828, %v858
          %v864 = vadd.f32 %v829, %v858
          %v865 = vadd.f32 %v830, %v858
          %v866 = vadd.f32 %v831, %v858
          %v867 = vadd.f32 %v832, %v858
          %v868 = vadd.f32 %v833, %v858
          %v869 = vadd.f32 %v834, %v858
          %v870 = vadd.f32 %v835, %v858
          %v871 = vadd.f32 %v836, %v858
          %v872 = vadd.f32 %v837, %v858
          %v873 = vadd.f32 %v838, %v858
          %v874 = vadd.f32 %v839, %v858
          %v875 = vadd.f32 %v840, %v858
          %v876 = vadd.f32 %v841, %v858
          %v877 = vadd.f32 %v842, %v858
          %v878 = vadd.f32 %v843, %v858
          %v879 = vadd.f32 %v844, %v858
          %v880 = vadd.f32 %v845, %v858
          %v881 = vadd.f32 %v846, %v858
          %v882 = vadd.f32 %v847, %v858
          %v883 = vadd.f32 %v848, %v858
          %v884 = vadd.f32 %v849, %v858
          %v885 = vadd.f32 %v850, %v858
          %v886 = vadd.f32 %v851, %v858
          %v887 = vadd.f32 %v852, %v858
          %v888 = vadd.f32 %v853, %v858
          %v889 = vadd.f32 %v854, %v858
          %v890 = vadd.f32 %v855, %v858
          %v891 = vadd.f32 %v856, %v858
          %v892 = vpack.c.bf16 %v861, %v860
          %v893 = vpack.c.bf16 %v863, %v862
          %v894 = vpack.c.bf16 %v865, %v864
          %v895 = vpack.c.bf16 %v867, %v866
          %v896 = vpack.c.bf16 %v869, %v868
          %v897 = vpack.c.bf16 %v871, %v870
          %v898 = vpack.c.bf16 %v873, %v872
          %v899 = vpack.c.bf16 %v875, %v874
          %v900 = vpack.c.bf16 %v877, %v876
          %v901 = vpack.c.bf16 %v879, %v878
          %v902 = vpack.c.bf16 %v881, %v880
          %v903 = vpack.c.bf16 %v883, %v882
          %v904 = vpack.c.bf16 %v885, %v884
          %v905 = vpack.c.bf16 %v887, %v886
          %v906 = vpack.c.bf16 %v889, %v888
          %v907 = vpack.c.bf16 %v891, %v890
          %v908 = vld [vmem:[#allocation14] sm:$0xf]
          %v909 = vld [vmem:[#allocation14 + $0x4] sm:$0xf]
          %v910 = vld [vmem:[#allocation14 + $0x8] sm:$0xf]
          %v911 = vld [vmem:[#allocation14 + $0xc] sm:$0xf]
          %v912 = vld [vmem:[#allocation14 + $0x10] sm:$0xf]
          %v913 = vld [vmem:[#allocation14 + $0x14] sm:$0xf]
          %v914 = vld [vmem:[#allocation14 + $0x18] sm:$0xf]
          %v915 = vld [vmem:[#allocation14 + $0x1c] sm:$0xf]
          %v916 = vld [vmem:[#allocation14 + $0x20] sm:$0xf]
          %v917 = vld [vmem:[#allocation14 + $0x24] sm:$0xf]
          %v918 = vld [vmem:[#allocation14 + $0x28] sm:$0xf]
          %v919 = vld [vmem:[#allocation14 + $0x2c] sm:$0xf]
          %v920 = vld [vmem:[#allocation14 + $0x30] sm:$0xf]
          %v921 = vld [vmem:[#allocation14 + $0x34] sm:$0xf]
          %v922 = vld [vmem:[#allocation14 + $0x38] sm:$0xf]
          %v923 = vld [vmem:[#allocation14 + $0x3c] sm:$0xf]
          %v924 = vld [vmem:[%s8] sm:$0x1]
          %v926 = vperm.slane %v924, 0
          %v944 = vunpack.c.l.b16 %v908
          %v945 = vunpack.c.l.b16 %v909
          %v946 = vunpack.c.l.b16 %v910
          %v947 = vunpack.c.l.b16 %v911
          %v948 = vunpack.c.l.b16 %v912
          %v949 = vunpack.c.l.b16 %v913
          %v950 = vunpack.c.l.b16 %v914
          %v951 = vunpack.c.l.b16 %v915
          %v952 = vunpack.c.l.b16 %v916
          %v953 = vunpack.c.l.b16 %v917
          %v954 = vunpack.c.l.b16 %v918
          %v955 = vunpack.c.l.b16 %v919
          %v956 = vunpack.c.l.b16 %v920
          %v957 = vunpack.c.l.b16 %v921
          %v958 = vunpack.c.l.b16 %v922
          %v959 = vunpack.c.l.b16 %v923
          %v960 = vpack.c.b16 %v945, %v944
          %v961 = vpack.c.b16 %v947, %v946
          %v962 = vpack.c.b16 %v949, %v948
          %v963 = vpack.c.b16 %v951, %v950
          %v964 = vpack.c.b16 %v953, %v952
          %v965 = vpack.c.b16 %v955, %v954
          %v966 = vpack.c.b16 %v957, %v956
          %v967 = vpack.c.b16 %v959, %v958
          %976 = vmatpush.bf16.msra.mxu0 %v967
          %977 = vmatpush.bf16.msra.mxu0 %v966
          %978 = vmatpush.bf16.msra.mxu0 %v965
          %979 = vmatpush.bf16.msra.mxu0 %v964
          %980 = vmatpush.bf16.msra.mxu0 %v963
          %981 = vmatpush.bf16.msra.mxu0 %v962
          %982 = vmatpush.bf16.msra.mxu0 %v961
          %983 = vmatpush.bf16.msra.mxu0 %v960
          %984 = vmatmul.bf16.gmra.mxu0 %v892
          %v985 = vpop.f32.mrf.mxu0
          %v986 = vadd.f32 %v926, %v985
          %v987 = vpop.f32.mrf.mxu0
          %v988 = vadd.f32 %v926, %v987
          %989 = vmatmul.bf16.gmra.mxu0 %v893
          %v990 = vpop.f32.mrf.mxu0
          %v991 = vadd.f32 %v926, %v990
          %v992 = vpop.f32.mrf.mxu0
          %v993 = vadd.f32 %v926, %v992
          %994 = vmatmul.bf16.gmra.mxu0 %v894
          %v995 = vpop.f32.mrf.mxu0
          %v996 = vadd.f32 %v926, %v995
          %v997 = vpop.f32.mrf.mxu0
          %v998 = vadd.f32 %v926, %v997
          %999 = vmatmul.bf16.gmra.mxu0 %v895
          %v1000 = vpop.f32.mrf.mxu0
          %v1001 = vadd.f32 %v926, %v1000
          %v1002 = vpop.f32.mrf.mxu0
          %v1003 = vadd.f32 %v926, %v1002
          %1004 = vmatmul.bf16.gmra.mxu0 %v896
          %v1005 = vpop.f32.mrf.mxu0
          %v1006 = vadd.f32 %v926, %v1005
          %v1007 = vpop.f32.mrf.mxu0
          %v1008 = vadd.f32 %v926, %v1007
          %1009 = vmatmul.bf16.gmra.mxu0 %v897
          %v1010 = vpop.f32.mrf.mxu0
          %v1011 = vadd.f32 %v926, %v1010
          %v1012 = vpop.f32.mrf.mxu0
          %v1013 = vadd.f32 %v926, %v1012
          %1014 = vmatmul.bf16.gmra.mxu0 %v898
          %v1015 = vpop.f32.mrf.mxu0
          %v1016 = vadd.f32 %v926, %v1015
          %v1017 = vpop.f32.mrf.mxu0
          %v1018 = vadd.f32 %v926, %v1017
          %1019 = vmatmul.bf16.gmra.mxu0 %v899
          %v1020 = vpop.f32.mrf.mxu0
          %v1021 = vadd.f32 %v926, %v1020
          %v1022 = vpop.f32.mrf.mxu0
          %v1023 = vadd.f32 %v926, %v1022
          %1024 = vmatmul.bf16.gmra.mxu0 %v900
          %v1025 = vpop.f32.mrf.mxu0
          %v1026 = vadd.f32 %v926, %v1025
          %v1027 = vpop.f32.mrf.mxu0
          %v1028 = vadd.f32 %v926, %v1027
          %1029 = vmatmul.bf16.gmra.mxu0 %v901
          %v1030 = vpop.f32.mrf.mxu0
          %v1031 = vadd.f32 %v926, %v1030
          %v1032 = vpop.f32.mrf.mxu0
          %v1033 = vadd.f32 %v926, %v1032
          %1034 = vmatmul.bf16.gmra.mxu0 %v902
          %v1035 = vpop.f32.mrf.mxu0
          %v1036 = vadd.f32 %v926, %v1035
          %v1037 = vpop.f32.mrf.mxu0
          %v1038 = vadd.f32 %v926, %v1037
          %1039 = vmatmul.bf16.gmra.mxu0 %v903
          %v1040 = vpop.f32.mrf.mxu0
          %v1041 = vadd.f32 %v926, %v1040
          %v1042 = vpop.f32.mrf.mxu0
          %v1043 = vadd.f32 %v926, %v1042
          %1044 = vmatmul.bf16.gmra.mxu0 %v904
          %v1045 = vpop.f32.mrf.mxu0
          %v1046 = vadd.f32 %v926, %v1045
          %v1047 = vpop.f32.mrf.mxu0
          %v1048 = vadd.f32 %v926, %v1047
          %1049 = vmatmul.bf16.gmra.mxu0 %v905
          %v1050 = vpop.f32.mrf.mxu0
          %v1051 = vadd.f32 %v926, %v1050
          %v1052 = vpop.f32.mrf.mxu0
          %v1053 = vadd.f32 %v926, %v1052
          %1054 = vmatmul.bf16.gmra.mxu0 %v906
          %v1055 = vpop.f32.mrf.mxu0
          %v1056 = vadd.f32 %v926, %v1055
          %v1057 = vpop.f32.mrf.mxu0
          %v1058 = vadd.f32 %v926, %v1057
          %1059 = vmatmul.bf16.gmra.mxu0 %v907
          %v1060 = vpop.f32.mrf.mxu0
          %v1061 = vadd.f32 %v926, %v1060
          %v1062 = vpop.f32.mrf.mxu0
          %v1063 = vadd.f32 %v926, %v1062
          %1064 = vdwg.mxu0
          %v1065 = vpack.c.bf16 %v986, %v986
          %v1066 = vpack.c.bf16 %v988, %v988
          %v1067 = vpack.c.bf16 %v991, %v991
          %v1068 = vpack.c.bf16 %v993, %v993
          %v1069 = vpack.c.bf16 %v996, %v996
          %v1070 = vpack.c.bf16 %v998, %v998
          %v1071 = vpack.c.bf16 %v1001, %v1001
          %v1072 = vpack.c.bf16 %v1003, %v1003
          %v1073 = vpack.c.bf16 %v1006, %v1006
          %v1074 = vpack.c.bf16 %v1008, %v1008
          %v1075 = vpack.c.bf16 %v1011, %v1011
          %v1076 = vpack.c.bf16 %v1013, %v1013
          %v1077 = vpack.c.bf16 %v1016, %v1016
          %v1078 = vpack.c.bf16 %v1018, %v1018
          %v1079 = vpack.c.bf16 %v1021, %v1021
          %v1080 = vpack.c.bf16 %v1023, %v1023
          %v1081 = vpack.c.bf16 %v1026, %v1026
          %v1082 = vpack.c.bf16 %v1028, %v1028
          %v1083 = vpack.c.bf16 %v1031, %v1031
          %v1084 = vpack.c.bf16 %v1033, %v1033
          %v1085 = vpack.c.bf16 %v1036, %v1036
          %v1086 = vpack.c.bf16 %v1038, %v1038
          %v1087 = vpack.c.bf16 %v1041, %v1041
          %v1088 = vpack.c.bf16 %v1043, %v1043
          %v1089 = vpack.c.bf16 %v1046, %v1046
          %v1090 = vpack.c.bf16 %v1048, %v1048
          %v1091 = vpack.c.bf16 %v1051, %v1051
          %v1092 = vpack.c.bf16 %v1053, %v1053
          %v1093 = vpack.c.bf16 %v1056, %v1056
          %v1094 = vpack.c.bf16 %v1058, %v1058
          %v1095 = vpack.c.bf16 %v1061, %v1061
          %v1096 = vpack.c.bf16 %v1063, %v1063
          %1097 = vst [vmem:[#allocation4] sm:$0xf] %v1065
          %1098 = vst [vmem:[#allocation4 + $0x4] sm:$0xf] %v1066
          %1099 = vst [vmem:[#allocation4 + $0x8] sm:$0xf] %v1067
          %1100 = vst [vmem:[#allocation4 + $0xc] sm:$0xf] %v1068
          %1101 = vst [vmem:[#allocation4 + $0x10] sm:$0xf] %v1069
          %1102 = vst [vmem:[#allocation4 + $0x14] sm:$0xf] %v1070
          %1103 = vst [vmem:[#allocation4 + $0x18] sm:$0xf] %v1071
          %1104 = vst [vmem:[#allocation4 + $0x1c] sm:$0xf] %v1072
          %1105 = vst [vmem:[#allocation4 + $0x20] sm:$0xf] %v1073
          %1106 = vst [vmem:[#allocation4 + $0x24] sm:$0xf] %v1074
          %1107 = vst [vmem:[#allocation4 + $0x28] sm:$0xf] %v1075
          %1108 = vst [vmem:[#allocation4 + $0x2c] sm:$0xf] %v1076
          %1109 = vst [vmem:[#allocation4 + $0x30] sm:$0xf] %v1077
          %1110 = vst [vmem:[#allocation4 + $0x34] sm:$0xf] %v1078
          %1111 = vst [vmem:[#allocation4 + $0x38] sm:$0xf] %v1079
          %1112 = vst [vmem:[#allocation4 + $0x3c] sm:$0xf] %v1080
          %1113 = vst [vmem:[#allocation4 + $0x40] sm:$0xf] %v1081
          %1114 = vst [vmem:[#allocation4 + $0x44] sm:$0xf] %v1082
          %1115 = vst [vmem:[#allocation4 + $0x48] sm:$0xf] %v1083
          %1116 = vst [vmem:[#allocation4 + $0x4c] sm:$0xf] %v1084
          %1117 = vst [vmem:[#allocation4 + $0x50] sm:$0xf] %v1085
          %1118 = vst [vmem:[#allocation4 + $0x54] sm:$0xf] %v1086
          %1119 = vst [vmem:[#allocation4 + $0x58] sm:$0xf] %v1087
          %1120 = vst [vmem:[#allocation4 + $0x5c] sm:$0xf] %v1088
          %1121 = vst [vmem:[#allocation4 + $0x60] sm:$0xf] %v1089
          %1122 = vst [vmem:[#allocation4 + $0x64] sm:$0xf] %v1090
          %1123 = vst [vmem:[#allocation4 + $0x68] sm:$0xf] %v1091
          %1124 = vst [vmem:[#allocation4 + $0x6c] sm:$0xf] %v1092
          %1125 = vst [vmem:[#allocation4 + $0x70] sm:$0xf] %v1093
          %1126 = vst [vmem:[#allocation4 + $0x74] sm:$0xf] %v1094
          %1127 = vst [vmem:[#allocation4 + $0x78] sm:$0xf] %v1095
          %1128 = vst [vmem:[#allocation4 + $0x7c] sm:$0xf] %v1096
          %v1129 = vld [vmem:[#allocation15] sm:$0xf]
          %v1130 = vld [vmem:[#allocation15 + $0x4] sm:$0xf]
          %v1131 = vld [vmem:[#allocation15 + $0x8] sm:$0xf]
          %v1132 = vld [vmem:[#allocation15 + $0xc] sm:$0xf]
          %v1133 = vld [vmem:[#allocation15 + $0x10] sm:$0xf]
          %v1134 = vld [vmem:[#allocation15 + $0x14] sm:$0xf]
          %v1135 = vld [vmem:[#allocation15 + $0x18] sm:$0xf]
          %v1136 = vld [vmem:[#allocation15 + $0x1c] sm:$0xf]
          %v1137 = vld [vmem:[#allocation15 + $0x20] sm:$0xf]
          %v1138 = vld [vmem:[#allocation15 + $0x24] sm:$0xf]
          %v1139 = vld [vmem:[#allocation15 + $0x28] sm:$0xf]
          %v1140 = vld [vmem:[#allocation15 + $0x2c] sm:$0xf]
          %v1141 = vld [vmem:[#allocation15 + $0x30] sm:$0xf]
          %v1142 = vld [vmem:[#allocation15 + $0x34] sm:$0xf]
          %v1143 = vld [vmem:[#allocation15 + $0x38] sm:$0xf]
          %v1144 = vld [vmem:[#allocation15 + $0x3c] sm:$0xf]
          %v1145 = vld [vmem:[%s10] sm:$0x1]
          %v1147 = vperm.slane %v1145, 0
          %v1165 = vunpack.c.l.b16 %v1129
          %v1166 = vunpack.c.l.b16 %v1130
          %v1167 = vunpack.c.l.b16 %v1131
          %v1168 = vunpack.c.l.b16 %v1132
          %v1169 = vunpack.c.l.b16 %v1133
          %v1170 = vunpack.c.l.b16 %v1134
          %v1171 = vunpack.c.l.b16 %v1135
          %v1172 = vunpack.c.l.b16 %v1136
          %v1173 = vunpack.c.l.b16 %v1137
          %v1174 = vunpack.c.l.b16 %v1138
          %v1175 = vunpack.c.l.b16 %v1139
          %v1176 = vunpack.c.l.b16 %v1140
          %v1177 = vunpack.c.l.b16 %v1141
          %v1178 = vunpack.c.l.b16 %v1142
          %v1179 = vunpack.c.l.b16 %v1143
          %v1180 = vunpack.c.l.b16 %v1144
          %v1181 = vpack.c.b16 %v1166, %v1165
          %v1182 = vpack.c.b16 %v1168, %v1167
          %v1183 = vpack.c.b16 %v1170, %v1169
          %v1184 = vpack.c.b16 %v1172, %v1171
          %v1185 = vpack.c.b16 %v1174, %v1173
          %v1186 = vpack.c.b16 %v1176, %v1175
          %v1187 = vpack.c.b16 %v1178, %v1177
          %v1188 = vpack.c.b16 %v1180, %v1179
          %1197 = vmatpush.bf16.msra.mxu0 %v1188
          %1198 = vmatpush.bf16.msra.mxu0 %v1187
          %1199 = vmatpush.bf16.msra.mxu0 %v1186
          %1200 = vmatpush.bf16.msra.mxu0 %v1185
          %1201 = vmatpush.bf16.msra.mxu0 %v1184
          %1202 = vmatpush.bf16.msra.mxu0 %v1183
          %1203 = vmatpush.bf16.msra.mxu0 %v1182
          %1204 = vmatpush.bf16.msra.mxu0 %v1181
          %1205 = vmatmul.bf16.gmra.mxu0 %v892
          %v1206 = vpop.f32.mrf.mxu0
          %v1207 = vadd.f32 %v1147, %v1206
          %v1208 = vpop.f32.mrf.mxu0
          %v1209 = vadd.f32 %v1147, %v1208
          %1210 = vmatmul.bf16.gmra.mxu0 %v893
          %v1211 = vpop.f32.mrf.mxu0
          %v1212 = vadd.f32 %v1147, %v1211
          %v1213 = vpop.f32.mrf.mxu0
          %v1214 = vadd.f32 %v1147, %v1213
          %1215 = vmatmul.bf16.gmra.mxu0 %v894
          %v1216 = vpop.f32.mrf.mxu0
          %v1217 = vadd.f32 %v1147, %v1216
          %v1218 = vpop.f32.mrf.mxu0
          %v1219 = vadd.f32 %v1147, %v1218
          %1220 = vmatmul.bf16.gmra.mxu0 %v895
          %v1221 = vpop.f32.mrf.mxu0
          %v1222 = vadd.f32 %v1147, %v1221
          %v1223 = vpop.f32.mrf.mxu0
          %v1224 = vadd.f32 %v1147, %v1223
          %1225 = vmatmul.bf16.gmra.mxu0 %v896
          %v1226 = vpop.f32.mrf.mxu0
          %v1227 = vadd.f32 %v1147, %v1226
          %v1228 = vpop.f32.mrf.mxu0
          %v1229 = vadd.f32 %v1147, %v1228
          %1230 = vmatmul.bf16.gmra.mxu0 %v897
          %v1231 = vpop.f32.mrf.mxu0
          %v1232 = vadd.f32 %v1147, %v1231
          %v1233 = vpop.f32.mrf.mxu0
          %v1234 = vadd.f32 %v1147, %v1233
          %1235 = vmatmul.bf16.gmra.mxu0 %v898
          %v1236 = vpop.f32.mrf.mxu0
          %v1237 = vadd.f32 %v1147, %v1236
          %v1238 = vpop.f32.mrf.mxu0
          %v1239 = vadd.f32 %v1147, %v1238
          %1240 = vmatmul.bf16.gmra.mxu0 %v899
          %v1241 = vpop.f32.mrf.mxu0
          %v1242 = vadd.f32 %v1147, %v1241
          %v1243 = vpop.f32.mrf.mxu0
          %v1244 = vadd.f32 %v1147, %v1243
          %1245 = vmatmul.bf16.gmra.mxu0 %v900
          %v1246 = vpop.f32.mrf.mxu0
          %v1247 = vadd.f32 %v1147, %v1246
          %v1248 = vpop.f32.mrf.mxu0
          %v1249 = vadd.f32 %v1147, %v1248
          %1250 = vmatmul.bf16.gmra.mxu0 %v901
          %v1251 = vpop.f32.mrf.mxu0
          %v1252 = vadd.f32 %v1147, %v1251
          %v1253 = vpop.f32.mrf.mxu0
          %v1254 = vadd.f32 %v1147, %v1253
          %1255 = vmatmul.bf16.gmra.mxu0 %v902
          %v1256 = vpop.f32.mrf.mxu0
          %v1257 = vadd.f32 %v1147, %v1256
          %v1258 = vpop.f32.mrf.mxu0
          %v1259 = vadd.f32 %v1147, %v1258
          %1260 = vmatmul.bf16.gmra.mxu0 %v903
          %v1261 = vpop.f32.mrf.mxu0
          %v1262 = vadd.f32 %v1147, %v1261
          %v1263 = vpop.f32.mrf.mxu0
          %v1264 = vadd.f32 %v1147, %v1263
          %1265 = vmatmul.bf16.gmra.mxu0 %v904
          %v1266 = vpop.f32.mrf.mxu0
          %v1267 = vadd.f32 %v1147, %v1266
          %v1268 = vpop.f32.mrf.mxu0
          %v1269 = vadd.f32 %v1147, %v1268
          %1270 = vmatmul.bf16.gmra.mxu0 %v905
          %v1271 = vpop.f32.mrf.mxu0
          %v1272 = vadd.f32 %v1147, %v1271
          %v1273 = vpop.f32.mrf.mxu0
          %v1274 = vadd.f32 %v1147, %v1273
          %1275 = vmatmul.bf16.gmra.mxu0 %v906
          %v1276 = vpop.f32.mrf.mxu0
          %v1277 = vadd.f32 %v1147, %v1276
          %v1278 = vpop.f32.mrf.mxu0
          %v1279 = vadd.f32 %v1147, %v1278
          %1280 = vmatmul.bf16.gmra.mxu0 %v907
          %v1281 = vpop.f32.mrf.mxu0
          %v1282 = vadd.f32 %v1147, %v1281
          %v1283 = vpop.f32.mrf.mxu0
          %v1284 = vadd.f32 %v1147, %v1283
          %1285 = vdwg.mxu0
          %v1286 = vpack.c.bf16 %v1207, %v1207
          %v1287 = vpack.c.bf16 %v1209, %v1209
          %v1288 = vpack.c.bf16 %v1212, %v1212
          %v1289 = vpack.c.bf16 %v1214, %v1214
          %v1290 = vpack.c.bf16 %v1217, %v1217
          %v1291 = vpack.c.bf16 %v1219, %v1219
          %v1292 = vpack.c.bf16 %v1222, %v1222
          %v1293 = vpack.c.bf16 %v1224, %v1224
          %v1294 = vpack.c.bf16 %v1227, %v1227
          %v1295 = vpack.c.bf16 %v1229, %v1229
          %v1296 = vpack.c.bf16 %v1232, %v1232
          %v1297 = vpack.c.bf16 %v1234, %v1234
          %v1298 = vpack.c.bf16 %v1237, %v1237
          %v1299 = vpack.c.bf16 %v1239, %v1239
          %v1300 = vpack.c.bf16 %v1242, %v1242
          %v1301 = vpack.c.bf16 %v1244, %v1244
          %v1302 = vpack.c.bf16 %v1247, %v1247
          %v1303 = vpack.c.bf16 %v1249, %v1249
          %v1304 = vpack.c.bf16 %v1252, %v1252
          %v1305 = vpack.c.bf16 %v1254, %v1254
          %v1306 = vpack.c.bf16 %v1257, %v1257
          %v1307 = vpack.c.bf16 %v1259, %v1259
          %v1308 = vpack.c.bf16 %v1262, %v1262
          %v1309 = vpack.c.bf16 %v1264, %v1264
          %v1310 = vpack.c.bf16 %v1267, %v1267
          %v1311 = vpack.c.bf16 %v1269, %v1269
          %v1312 = vpack.c.bf16 %v1272, %v1272
          %v1313 = vpack.c.bf16 %v1274, %v1274
          %v1314 = vpack.c.bf16 %v1277, %v1277
          %v1315 = vpack.c.bf16 %v1279, %v1279
          %v1316 = vpack.c.bf16 %v1282, %v1282
          %v1317 = vpack.c.bf16 %v1284, %v1284
          %1318 = vst [vmem:[#allocation5] sm:$0xf] %v1286
          %1319 = vst [vmem:[#allocation5 + $0x4] sm:$0xf] %v1287
          %1320 = vst [vmem:[#allocation5 + $0x8] sm:$0xf] %v1288
          %1321 = vst [vmem:[#allocation5 + $0xc] sm:$0xf] %v1289
          %1322 = vst [vmem:[#allocation5 + $0x10] sm:$0xf] %v1290
          %1323 = vst [vmem:[#allocation5 + $0x14] sm:$0xf] %v1291
          %1324 = vst [vmem:[#allocation5 + $0x18] sm:$0xf] %v1292
          %1325 = vst [vmem:[#allocation5 + $0x1c] sm:$0xf] %v1293
          %1326 = vst [vmem:[#allocation5 + $0x20] sm:$0xf] %v1294
          %1327 = vst [vmem:[#allocation5 + $0x24] sm:$0xf] %v1295
          %1328 = vst [vmem:[#allocation5 + $0x28] sm:$0xf] %v1296
          %1329 = vst [vmem:[#allocation5 + $0x2c] sm:$0xf] %v1297
          %1330 = vst [vmem:[#allocation5 + $0x30] sm:$0xf] %v1298
          %1331 = vst [vmem:[#allocation5 + $0x34] sm:$0xf] %v1299
          %1332 = vst [vmem:[#allocation5 + $0x38] sm:$0xf] %v1300
          %1333 = vst [vmem:[#allocation5 + $0x3c] sm:$0xf] %v1301
          %1334 = vst [vmem:[#allocation5 + $0x40] sm:$0xf] %v1302
          %1335 = vst [vmem:[#allocation5 + $0x44] sm:$0xf] %v1303
          %1336 = vst [vmem:[#allocation5 + $0x48] sm:$0xf] %v1304
          %1337 = vst [vmem:[#allocation5 + $0x4c] sm:$0xf] %v1305
          %1338 = vst [vmem:[#allocation5 + $0x50] sm:$0xf] %v1306
          %1339 = vst [vmem:[#allocation5 + $0x54] sm:$0xf] %v1307
          %1340 = vst [vmem:[#allocation5 + $0x58] sm:$0xf] %v1308
          %1341 = vst [vmem:[#allocation5 + $0x5c] sm:$0xf] %v1309
          %1342 = vst [vmem:[#allocation5 + $0x60] sm:$0xf] %v1310
          %1343 = vst [vmem:[#allocation5 + $0x64] sm:$0xf] %v1311
          %1344 = vst [vmem:[#allocation5 + $0x68] sm:$0xf] %v1312
          %1345 = vst [vmem:[#allocation5 + $0x6c] sm:$0xf] %v1313
          %1346 = vst [vmem:[#allocation5 + $0x70] sm:$0xf] %v1314
          %1347 = vst [vmem:[#allocation5 + $0x74] sm:$0xf] %v1315
          %1348 = vst [vmem:[#allocation5 + $0x78] sm:$0xf] %v1316
          %1349 = vst [vmem:[#allocation5 + $0x7c] sm:$0xf] %v1317
        $region104: #{tpu_custom_call.1} parent=71 // pred_fallthru
          _
        %v1350 = vld [vmem:[#allocation2] sm:$0x1]
        %v1351 = vld [vmem:[#allocation3] sm:$0x1]
        %v1352 = vld [vmem:[%s529] sm:$0xff]
        %v1353 = vld [vmem:[%s529 + $0x8] sm:$0xff]
        %v1354 = vld [vmem:[%s529 + $0x10] sm:$0xff]
        %v1355 = vld [vmem:[%s529 + $0x18] sm:$0xff]
        %v1356 = vld [vmem:[%s529 + $0x20] sm:$0xff]
        %v1357 = vld [vmem:[%s529 + $0x28] sm:$0xff]
        %v1358 = vld [vmem:[%s529 + $0x30] sm:$0xff]
        %v1359 = vld [vmem:[%s529 + $0x38] sm:$0xff]
        %v1360 = vld [vmem:[%s529 + $0x40] sm:$0xff]
        %v1361 = vld [vmem:[%s529 + $0x48] sm:$0xff]
        %v1362 = vld [vmem:[%s529 + $0x50] sm:$0xff]
        %v1363 = vld [vmem:[%s529 + $0x58] sm:$0xff]
        %v1364 = vld [vmem:[%s529 + $0x60] sm:$0xff]
        %v1365 = vld [vmem:[%s529 + $0x68] sm:$0xff]
        %v1366 = vld [vmem:[%s529 + $0x70] sm:$0xff]
        %v1367 = vld [vmem:[%s529 + $0x78] sm:$0xff]
        %v1369 = vperm.slane %v1350, 0
        %v1371 = vmul.f32 %v1352, %v1369
        %v1372 = vmul.f32 %v1353, %v1369
        %v1373 = vmul.f32 %v1354, %v1369
        %v1374 = vmul.f32 %v1355, %v1369
        %v1375 = vmul.f32 %v1356, %v1369
        %v1376 = vmul.f32 %v1357, %v1369
        %v1377 = vmul.f32 %v1358, %v1369
        %v1378 = vmul.f32 %v1359, %v1369
        %v1379 = vmul.f32 %v1360, %v1369
        %v1380 = vmul.f32 %v1361, %v1369
        %v1381 = vmul.f32 %v1362, %v1369
        %v1382 = vmul.f32 %v1363, %v1369
        %v1383 = vmul.f32 %v1364, %v1369
        %v1384 = vmul.f32 %v1365, %v1369
        %v1385 = vmul.f32 %v1366, %v1369
        %v1386 = vmul.f32 %v1367, %v1369
        %v1388 = vperm.slane %v1351, 0
        %v1390 = vadd.f32 %v1371, %v1388
        %v1391 = vadd.f32 %v1372, %v1388
        %v1392 = vadd.f32 %v1373, %v1388
        %v1393 = vadd.f32 %v1374, %v1388
        %v1394 = vadd.f32 %v1375, %v1388
        %v1395 = vadd.f32 %v1376, %v1388
        %v1396 = vadd.f32 %v1377, %v1388
        %v1397 = vadd.f32 %v1378, %v1388
        %v1398 = vadd.f32 %v1379, %v1388
        %v1399 = vadd.f32 %v1380, %v1388
        %v1400 = vadd.f32 %v1381, %v1388
        %v1401 = vadd.f32 %v1382, %v1388
        %v1402 = vadd.f32 %v1383, %v1388
        %v1403 = vadd.f32 %v1384, %v1388
        %v1404 = vadd.f32 %v1385, %v1388
        %v1405 = vadd.f32 %v1386, %v1388
        %v1406 = vpack.c.bf16 %v1391, %v1390
        %v1407 = vpack.c.bf16 %v1393, %v1392
        %v1408 = vpack.c.bf16 %v1395, %v1394
        %v1409 = vpack.c.bf16 %v1397, %v1396
        %v1410 = vpack.c.bf16 %v1399, %v1398
        %v1411 = vpack.c.bf16 %v1401, %v1400
        %v1412 = vpack.c.bf16 %v1403, %v1402
        %v1413 = vpack.c.bf16 %v1405, %v1404
        %v1414 = vld [vmem:[#allocation12] sm:$0xf]
        %v1415 = vld [vmem:[#allocation12 + $0x4] sm:$0xf]
        %v1416 = vld [vmem:[#allocation12 + $0x8] sm:$0xf]
        %v1417 = vld [vmem:[#allocation12 + $0xc] sm:$0xf]
        %v1418 = vld [vmem:[#allocation12 + $0x10] sm:$0xf]
        %v1419 = vld [vmem:[#allocation12 + $0x14] sm:$0xf]
        %v1420 = vld [vmem:[#allocation12 + $0x18] sm:$0xf]
        %v1421 = vld [vmem:[#allocation12 + $0x1c] sm:$0xf]
        %v1422 = vld [vmem:[#allocation12 + $0x20] sm:$0xf]
        %v1423 = vld [vmem:[#allocation12 + $0x24] sm:$0xf]
        %v1424 = vld [vmem:[#allocation12 + $0x28] sm:$0xf]
        %v1425 = vld [vmem:[#allocation12 + $0x2c] sm:$0xf]
        %v1426 = vld [vmem:[#allocation12 + $0x30] sm:$0xf]
        %v1427 = vld [vmem:[#allocation12 + $0x34] sm:$0xf]
        %v1428 = vld [vmem:[#allocation12 + $0x38] sm:$0xf]
        %v1429 = vld [vmem:[#allocation12 + $0x3c] sm:$0xf]
        %v1430 = vld [vmem:[%s6] sm:$0x1]
        %v1432 = vperm.slane %v1430, 0
        %v1450 = vunpack.c.l.b16 %v1414
        %v1451 = vunpack.c.l.b16 %v1415
        %v1452 = vunpack.c.l.b16 %v1416
        %v1453 = vunpack.c.l.b16 %v1417
        %v1454 = vunpack.c.l.b16 %v1418
        %v1455 = vunpack.c.l.b16 %v1419
        %v1456 = vunpack.c.l.b16 %v1420
        %v1457 = vunpack.c.l.b16 %v1421
        %v1458 = vunpack.c.l.b16 %v1422
        %v1459 = vunpack.c.l.b16 %v1423
        %v1460 = vunpack.c.l.b16 %v1424
        %v1461 = vunpack.c.l.b16 %v1425
        %v1462 = vunpack.c.l.b16 %v1426
        %v1463 = vunpack.c.l.b16 %v1427
        %v1464 = vunpack.c.l.b16 %v1428
        %v1465 = vunpack.c.l.b16 %v1429
        %v1466 = vpack.c.b16 %v1451, %v1450
        %v1467 = vpack.c.b16 %v1453, %v1452
        %v1468 = vpack.c.b16 %v1455, %v1454
        %v1469 = vpack.c.b16 %v1457, %v1456
        %v1470 = vpack.c.b16 %v1459, %v1458
        %v1471 = vpack.c.b16 %v1461, %v1460
        %v1472 = vpack.c.b16 %v1463, %v1462
        %v1473 = vpack.c.b16 %v1465, %v1464
        %1482 = vmatpush.bf16.msra.mxu0 %v1473
        %1483 = vmatpush.bf16.msra.mxu0 %v1472
        %1484 = vmatpush.bf16.msra.mxu0 %v1471
        %1485 = vmatpush.bf16.msra.mxu0 %v1470
        %1486 = vmatpush.bf16.msra.mxu0 %v1469
        %1487 = vmatpush.bf16.msra.mxu0 %v1468
        %1488 = vmatpush.bf16.msra.mxu0 %v1467
        %1489 = vmatpush.bf16.msra.mxu0 %v1466
        %1490 = vmatmul.bf16.gmra.mxu0 %v1406
        %v1491 = vpop.f32.mrf.mxu0
        %v1492 = vadd.f32 %v1432, %v1491
        %v1493 = vpop.f32.mrf.mxu0
        %v1494 = vadd.f32 %v1432, %v1493
        %1495 = vmatmul.bf16.gmra.mxu0 %v1407
        %v1496 = vpop.f32.mrf.mxu0
        %v1497 = vadd.f32 %v1432, %v1496
        %v1498 = vpop.f32.mrf.mxu0
        %v1499 = vadd.f32 %v1432, %v1498
        %1500 = vmatmul.bf16.gmra.mxu0 %v1408
        %v1501 = vpop.f32.mrf.mxu0
        %v1502 = vadd.f32 %v1432, %v1501
        %v1503 = vpop.f32.mrf.mxu0
        %v1504 = vadd.f32 %v1432, %v1503
        %1505 = vmatmul.bf16.gmra.mxu0 %v1409
        %v1506 = vpop.f32.mrf.mxu0
        %v1507 = vadd.f32 %v1432, %v1506
        %v1508 = vpop.f32.mrf.mxu0
        %v1509 = vadd.f32 %v1432, %v1508
        %1510 = vmatmul.bf16.gmra.mxu0 %v1410
        %v1511 = vpop.f32.mrf.mxu0
        %v1512 = vadd.f32 %v1432, %v1511
        %v1513 = vpop.f32.mrf.mxu0
        %v1514 = vadd.f32 %v1432, %v1513
        %1515 = vmatmul.bf16.gmra.mxu0 %v1411
        %v1516 = vpop.f32.mrf.mxu0
        %v1517 = vadd.f32 %v1432, %v1516
        %v1518 = vpop.f32.mrf.mxu0
        %v1519 = vadd.f32 %v1432, %v1518
        %1520 = vmatmul.bf16.gmra.mxu0 %v1412
        %v1521 = vpop.f32.mrf.mxu0
        %v1522 = vadd.f32 %v1432, %v1521
        %v1523 = vpop.f32.mrf.mxu0
        %v1524 = vadd.f32 %v1432, %v1523
        %1525 = vmatmul.bf16.gmra.mxu0 %v1413
        %v1526 = vpop.f32.mrf.mxu0
        %v1527 = vadd.f32 %v1432, %v1526
        %v1528 = vpop.f32.mrf.mxu0
        %v1529 = vadd.f32 %v1432, %v1528
        %1530 = vdwg.mxu0
        %v1531 = vpack.c.bf16 %v1494, %v1492
        %v1532 = vpack.c.bf16 %v1499, %v1497
        %v1533 = vpack.c.bf16 %v1504, %v1502
        %v1534 = vpack.c.bf16 %v1509, %v1507
        %v1535 = vpack.c.bf16 %v1514, %v1512
        %v1536 = vpack.c.bf16 %v1519, %v1517
        %v1537 = vpack.c.bf16 %v1524, %v1522
        %v1538 = vpack.c.bf16 %v1529, %v1527
        %v1539 = vld [vmem:[#allocation4] sm:$0xf]
        %v1540 = vld [vmem:[#allocation4 + $0x4] sm:$0xf]
        %v1541 = vld [vmem:[#allocation4 + $0x8] sm:$0xf]
        %v1542 = vld [vmem:[#allocation4 + $0xc] sm:$0xf]
        %v1543 = vld [vmem:[#allocation4 + $0x10] sm:$0xf]
        %v1544 = vld [vmem:[#allocation4 + $0x14] sm:$0xf]
        %v1545 = vld [vmem:[#allocation4 + $0x18] sm:$0xf]
        %v1546 = vld [vmem:[#allocation4 + $0x1c] sm:$0xf]
        %v1547 = vld [vmem:[#allocation4 + $0x20] sm:$0xf]
        %v1548 = vld [vmem:[#allocation4 + $0x24] sm:$0xf]
        %v1549 = vld [vmem:[#allocation4 + $0x28] sm:$0xf]
        %v1550 = vld [vmem:[#allocation4 + $0x2c] sm:$0xf]
        %v1551 = vld [vmem:[#allocation4 + $0x30] sm:$0xf]
        %v1552 = vld [vmem:[#allocation4 + $0x34] sm:$0xf]
        %v1553 = vld [vmem:[#allocation4 + $0x38] sm:$0xf]
        %v1554 = vld [vmem:[#allocation4 + $0x3c] sm:$0xf]
        %v1555 = vld [vmem:[#allocation5] sm:$0xf]
        %v1556 = vld [vmem:[#allocation5 + $0x4] sm:$0xf]
        %v1557 = vld [vmem:[#allocation5 + $0x8] sm:$0xf]
        %v1558 = vld [vmem:[#allocation5 + $0xc] sm:$0xf]
        %v1559 = vld [vmem:[#allocation5 + $0x10] sm:$0xf]
        %v1560 = vld [vmem:[#allocation5 + $0x14] sm:$0xf]
        %v1561 = vld [vmem:[#allocation5 + $0x18] sm:$0xf]
        %v1562 = vld [vmem:[#allocation5 + $0x1c] sm:$0xf]
        %v1563 = vld [vmem:[#allocation5 + $0x20] sm:$0xf]
        %v1564 = vld [vmem:[#allocation5 + $0x24] sm:$0xf]
        %v1565 = vld [vmem:[#allocation5 + $0x28] sm:$0xf]
        %v1566 = vld [vmem:[#allocation5 + $0x2c] sm:$0xf]
        %v1567 = vld [vmem:[#allocation5 + $0x30] sm:$0xf]
        %v1568 = vld [vmem:[#allocation5 + $0x34] sm:$0xf]
        %v1569 = vld [vmem:[#allocation5 + $0x38] sm:$0xf]
        %v1570 = vld [vmem:[#allocation5 + $0x3c] sm:$0xf]
        %v1587 = vunpack.c.l.b16 %v1539
        %v1588 = vunpack.c.l.b16 %v1540
        %v1589 = vunpack.c.l.b16 %v1541
        %v1590 = vunpack.c.l.b16 %v1542
        %v1591 = vunpack.c.l.b16 %v1543
        %v1592 = vunpack.c.l.b16 %v1544
        %v1593 = vunpack.c.l.b16 %v1545
        %v1594 = vunpack.c.l.b16 %v1546
        %v1595 = vunpack.c.l.b16 %v1547
        %v1596 = vunpack.c.l.b16 %v1548
        %v1597 = vunpack.c.l.b16 %v1549
        %v1598 = vunpack.c.l.b16 %v1550
        %v1599 = vunpack.c.l.b16 %v1551
        %v1600 = vunpack.c.l.b16 %v1552
        %v1601 = vunpack.c.l.b16 %v1553
        %v1602 = vunpack.c.l.b16 %v1554
        %v1603 = vpack.c.b16 %v1588, %v1587
        %v1604 = vpack.c.b16 %v1590, %v1589
        %v1605 = vpack.c.b16 %v1592, %v1591
        %v1606 = vpack.c.b16 %v1594, %v1593
        %v1607 = vpack.c.b16 %v1596, %v1595
        %v1608 = vpack.c.b16 %v1598, %v1597
        %v1609 = vpack.c.b16 %v1600, %v1599
        %v1610 = vpack.c.b16 %v1602, %v1601
        %1619 = vmatpush.bf16.xpose.msra.mxu0 %v1610
        %1620 = vmatpush.bf16.xpose.msra.mxu0 %v1609
        %1621 = vmatpush.bf16.xpose.msra.mxu0 %v1608
        %1622 = vmatpush.bf16.xpose.msra.mxu0 %v1607
        %1623 = vmatpush.bf16.xpose.msra.mxu0 %v1606
        %1624 = vmatpush.bf16.xpose.msra.mxu0 %v1605
        %1625 = vmatpush.bf16.xpose.msra.mxu0 %v1604
        %1626 = vmatpush.bf16.xpose.msra.mxu0 %v1603
        %1627 = vmatmul.bf16.gmra.mxu0 %v1531
        %v1628 = vpop.f32.mrf.mxu0
        %v1629 = vadd.f32 0.0, %v1628
        %v1630 = vpop.f32.mrf.mxu0
        %v1631 = vadd.f32 0.0, %v1630
        %1632 = vmatmul.bf16.gmra.mxu0 %v1532
        %v1633 = vpop.f32.mrf.mxu0
        %v1634 = vadd.f32 0.0, %v1633
        %v1635 = vpop.f32.mrf.mxu0
        %v1636 = vadd.f32 0.0, %v1635
        %1637 = vmatmul.bf16.gmra.mxu0 %v1533
        %v1638 = vpop.f32.mrf.mxu0
        %v1639 = vadd.f32 0.0, %v1638
        %v1640 = vpop.f32.mrf.mxu0
        %v1641 = vadd.f32 0.0, %v1640
        %1642 = vmatmul.bf16.gmra.mxu0 %v1534
        %v1643 = vpop.f32.mrf.mxu0
        %v1644 = vadd.f32 0.0, %v1643
        %v1645 = vpop.f32.mrf.mxu0
        %v1646 = vadd.f32 0.0, %v1645
        %1647 = vmatmul.bf16.gmra.mxu0 %v1535
        %v1648 = vpop.f32.mrf.mxu0
        %v1649 = vadd.f32 0.0, %v1648
        %v1650 = vpop.f32.mrf.mxu0
        %v1651 = vadd.f32 0.0, %v1650
        %1652 = vmatmul.bf16.gmra.mxu0 %v1536
        %v1653 = vpop.f32.mrf.mxu0
        %v1654 = vadd.f32 0.0, %v1653
        %v1655 = vpop.f32.mrf.mxu0
        %v1656 = vadd.f32 0.0, %v1655
        %1657 = vmatmul.bf16.gmra.mxu0 %v1537
        %v1658 = vpop.f32.mrf.mxu0
        %v1659 = vadd.f32 0.0, %v1658
        %v1660 = vpop.f32.mrf.mxu0
        %v1661 = vadd.f32 0.0, %v1660
        %1662 = vmatmul.bf16.gmra.mxu0 %v1538
        %v1663 = vpop.f32.mrf.mxu0
        %v1664 = vadd.f32 0.0, %v1663
        %v1665 = vpop.f32.mrf.mxu0
        %v1666 = vadd.f32 0.0, %v1665
        %1667 = vdwg.mxu0
        %1668 = vmax.xlane.f32.xlu0 %v1629
        %v1669 = vpop.xlane.xlu0 %1668
        %1670 = vmax.xlane.f32.xlu0 %v1631
        %v1671 = vpop.xlane.xlu0 %1670
        %1672 = vmax.xlane.f32.xlu0 %v1634
        %v1673 = vpop.xlane.xlu0 %1672
        %1674 = vmax.xlane.f32.xlu0 %v1636
        %v1675 = vpop.xlane.xlu0 %1674
        %1676 = vmax.xlane.f32.xlu0 %v1639
        %v1677 = vpop.xlane.xlu0 %1676
        %1678 = vmax.xlane.f32.xlu0 %v1641
        %v1679 = vpop.xlane.xlu0 %1678
        %1680 = vmax.xlane.f32.xlu0 %v1644
        %v1681 = vpop.xlane.xlu0 %1680
        %1682 = vmax.xlane.f32.xlu0 %v1646
        %v1683 = vpop.xlane.xlu0 %1682
        %1684 = vmax.xlane.f32.xlu0 %v1649
        %v1685 = vpop.xlane.xlu0 %1684
        %1686 = vmax.xlane.f32.xlu0 %v1651
        %v1687 = vpop.xlane.xlu0 %1686
        %1688 = vmax.xlane.f32.xlu0 %v1654
        %v1689 = vpop.xlane.xlu0 %1688
        %1690 = vmax.xlane.f32.xlu0 %v1656
        %v1691 = vpop.xlane.xlu0 %1690
        %1692 = vmax.xlane.f32.xlu0 %v1659
        %v1693 = vpop.xlane.xlu0 %1692
        %1694 = vmax.xlane.f32.xlu0 %v1661
        %v1695 = vpop.xlane.xlu0 %1694
        %1696 = vmax.xlane.f32.xlu0 %v1664
        %v1697 = vpop.xlane.xlu0 %1696
        %1698 = vmax.xlane.f32.xlu0 %v1666
        %v1699 = vpop.xlane.xlu0 %1698
        %v1700 = vsub.f32 -inf, %v1669
        %v1701 = vsub.f32 -inf, %v1671
        %v1702 = vsub.f32 -inf, %v1673
        %v1703 = vsub.f32 -inf, %v1675
        %v1704 = vsub.f32 -inf, %v1677
        %v1705 = vsub.f32 -inf, %v1679
        %v1706 = vsub.f32 -inf, %v1681
        %v1707 = vsub.f32 -inf, %v1683
        %v1708 = vsub.f32 -inf, %v1685
        %v1709 = vsub.f32 -inf, %v1687
        %v1710 = vsub.f32 -inf, %v1689
        %v1711 = vsub.f32 -inf, %v1691
        %v1712 = vsub.f32 -inf, %v1693
        %v1713 = vsub.f32 -inf, %v1695
        %v1714 = vsub.f32 -inf, %v1697
        %v1715 = vsub.f32 -inf, %v1699
        %v1716 = vmul.f32 %v1700, 1.442695
        %v1717 = vpow.pop %v1716
        %v1718 = vmul.f32 %v1701, 1.442695
        %v1719 = vpow.pop %v1718
        %v1720 = vmul.f32 %v1702, 1.442695
        %v1721 = vpow.pop %v1720
        %v1722 = vmul.f32 %v1703, 1.442695
        %v1723 = vpow.pop %v1722
        %v1724 = vmul.f32 %v1704, 1.442695
        %v1725 = vpow.pop %v1724
        %v1726 = vmul.f32 %v1705, 1.442695
        %v1727 = vpow.pop %v1726
        %v1728 = vmul.f32 %v1706, 1.442695
        %v1729 = vpow.pop %v1728
        %v1730 = vmul.f32 %v1707, 1.442695
        %v1731 = vpow.pop %v1730
        %v1732 = vmul.f32 %v1708, 1.442695
        %v1733 = vpow.pop %v1732
        %v1734 = vmul.f32 %v1709, 1.442695
        %v1735 = vpow.pop %v1734
        %v1736 = vmul.f32 %v1710, 1.442695
        %v1737 = vpow.pop %v1736
        %v1738 = vmul.f32 %v1711, 1.442695
        %v1739 = vpow.pop %v1738
        %v1740 = vmul.f32 %v1712, 1.442695
        %v1741 = vpow.pop %v1740
        %v1742 = vmul.f32 %v1713, 1.442695
        %v1743 = vpow.pop %v1742
        %v1744 = vmul.f32 %v1714, 1.442695
        %v1745 = vpow.pop %v1744
        %v1746 = vmul.f32 %v1715, 1.442695
        %v1747 = vpow.pop %v1746
        %v1748 = vsub.f32 %v1629, %v1669
        %v1749 = vsub.f32 %v1631, %v1671
        %v1750 = vsub.f32 %v1634, %v1673
        %v1751 = vsub.f32 %v1636, %v1675
        %v1752 = vsub.f32 %v1639, %v1677
        %v1753 = vsub.f32 %v1641, %v1679
        %v1754 = vsub.f32 %v1644, %v1681
        %v1755 = vsub.f32 %v1646, %v1683
        %v1756 = vsub.f32 %v1649, %v1685
        %v1757 = vsub.f32 %v1651, %v1687
        %v1758 = vsub.f32 %v1654, %v1689
        %v1759 = vsub.f32 %v1656, %v1691
        %v1760 = vsub.f32 %v1659, %v1693
        %v1761 = vsub.f32 %v1661, %v1695
        %v1762 = vsub.f32 %v1664, %v1697
        %v1763 = vsub.f32 %v1666, %v1699
        %v1764 = vmul.f32 %v1748, 1.442695
        %v1765 = vpow.pop %v1764
        %v1766 = vmul.f32 %v1749, 1.442695
        %v1767 = vpow.pop %v1766
        %v1768 = vmul.f32 %v1750, 1.442695
        %v1769 = vpow.pop %v1768
        %v1770 = vmul.f32 %v1751, 1.442695
        %v1771 = vpow.pop %v1770
        %v1772 = vmul.f32 %v1752, 1.442695
        %v1773 = vpow.pop %v1772
        %v1774 = vmul.f32 %v1753, 1.442695
        %v1775 = vpow.pop %v1774
        %v1776 = vmul.f32 %v1754, 1.442695
        %v1777 = vpow.pop %v1776
        %v1778 = vmul.f32 %v1755, 1.442695
        %v1779 = vpow.pop %v1778
        %v1780 = vmul.f32 %v1756, 1.442695
        %v1781 = vpow.pop %v1780
        %v1782 = vmul.f32 %v1757, 1.442695
        %v1783 = vpow.pop %v1782
        %v1784 = vmul.f32 %v1758, 1.442695
        %v1785 = vpow.pop %v1784
        %v1786 = vmul.f32 %v1759, 1.442695
        %v1787 = vpow.pop %v1786
        %v1788 = vmul.f32 %v1760, 1.442695
        %v1789 = vpow.pop %v1788
        %v1790 = vmul.f32 %v1761, 1.442695
        %v1791 = vpow.pop %v1790
        %v1792 = vmul.f32 %v1762, 1.442695
        %v1793 = vpow.pop %v1792
        %v1794 = vmul.f32 %v1763, 1.442695
        %v1795 = vpow.pop %v1794
        %v1796 = vmul.f32 %v1717, 0.0
        %v1797 = vmul.f32 %v1719, 0.0
        %v1798 = vmul.f32 %v1721, 0.0
        %v1799 = vmul.f32 %v1723, 0.0
        %v1800 = vmul.f32 %v1725, 0.0
        %v1801 = vmul.f32 %v1727, 0.0
        %v1802 = vmul.f32 %v1729, 0.0
        %v1803 = vmul.f32 %v1731, 0.0
        %v1804 = vmul.f32 %v1733, 0.0
        %v1805 = vmul.f32 %v1735, 0.0
        %v1806 = vmul.f32 %v1737, 0.0
        %v1807 = vmul.f32 %v1739, 0.0
        %v1808 = vmul.f32 %v1741, 0.0
        %v1809 = vmul.f32 %v1743, 0.0
        %v1810 = vmul.f32 %v1745, 0.0
        %v1811 = vmul.f32 %v1747, 0.0
        %1812 = vadd.xlane.f32.xlu0 %v1765
        %v1813 = vpop.xlane.xlu0 %1812
        %1814 = vadd.xlane.f32.xlu0 %v1767
        %v1815 = vpop.xlane.xlu0 %1814
        %1816 = vadd.xlane.f32.xlu0 %v1769
        %v1817 = vpop.xlane.xlu0 %1816
        %1818 = vadd.xlane.f32.xlu0 %v1771
        %v1819 = vpop.xlane.xlu0 %1818
        %1820 = vadd.xlane.f32.xlu0 %v1773
        %v1821 = vpop.xlane.xlu0 %1820
        %1822 = vadd.xlane.f32.xlu0 %v1775
        %v1823 = vpop.xlane.xlu0 %1822
        %1824 = vadd.xlane.f32.xlu0 %v1777
        %v1825 = vpop.xlane.xlu0 %1824
        %1826 = vadd.xlane.f32.xlu0 %v1779
        %v1827 = vpop.xlane.xlu0 %1826
        %1828 = vadd.xlane.f32.xlu0 %v1781
        %v1829 = vpop.xlane.xlu0 %1828
        %1830 = vadd.xlane.f32.xlu0 %v1783
        %v1831 = vpop.xlane.xlu0 %1830
        %1832 = vadd.xlane.f32.xlu0 %v1785
        %v1833 = vpop.xlane.xlu0 %1832
        %1834 = vadd.xlane.f32.xlu0 %v1787
        %v1835 = vpop.xlane.xlu0 %1834
        %1836 = vadd.xlane.f32.xlu0 %v1789
        %v1837 = vpop.xlane.xlu0 %1836
        %1838 = vadd.xlane.f32.xlu0 %v1791
        %v1839 = vpop.xlane.xlu0 %1838
        %1840 = vadd.xlane.f32.xlu0 %v1793
        %v1841 = vpop.xlane.xlu0 %1840
        %1842 = vadd.xlane.f32.xlu0 %v1795
        %v1843 = vpop.xlane.xlu0 %1842
        %v1844 = vadd.f32 %v1796, %v1813
        %v1845 = vadd.f32 %v1797, %v1815
        %v1846 = vadd.f32 %v1798, %v1817
        %v1847 = vadd.f32 %v1799, %v1819
        %v1848 = vadd.f32 %v1800, %v1821
        %v1849 = vadd.f32 %v1801, %v1823
        %v1850 = vadd.f32 %v1802, %v1825
        %v1851 = vadd.f32 %v1803, %v1827
        %v1852 = vadd.f32 %v1804, %v1829
        %v1853 = vadd.f32 %v1805, %v1831
        %v1854 = vadd.f32 %v1806, %v1833
        %v1855 = vadd.f32 %v1807, %v1835
        %v1856 = vadd.f32 %v1808, %v1837
        %v1857 = vadd.f32 %v1809, %v1839
        %v1858 = vadd.f32 %v1810, %v1841
        %v1859 = vadd.f32 %v1811, %v1843
        %v1860 = vpack.c.bf16 %v1767, %v1765
        %v1861 = vpack.c.bf16 %v1771, %v1769
        %v1862 = vpack.c.bf16 %v1775, %v1773
        %v1863 = vpack.c.bf16 %v1779, %v1777
        %v1864 = vpack.c.bf16 %v1783, %v1781
        %v1865 = vpack.c.bf16 %v1787, %v1785
        %v1866 = vpack.c.bf16 %v1791, %v1789
        %v1867 = vpack.c.bf16 %v1795, %v1793
        %v1884 = vunpack.c.l.b16 %v1555
        %v1885 = vunpack.c.l.b16 %v1556
        %v1886 = vunpack.c.l.b16 %v1557
        %v1887 = vunpack.c.l.b16 %v1558
        %v1888 = vunpack.c.l.b16 %v1559
        %v1889 = vunpack.c.l.b16 %v1560
        %v1890 = vunpack.c.l.b16 %v1561
        %v1891 = vunpack.c.l.b16 %v1562
        %v1892 = vunpack.c.l.b16 %v1563
        %v1893 = vunpack.c.l.b16 %v1564
        %v1894 = vunpack.c.l.b16 %v1565
        %v1895 = vunpack.c.l.b16 %v1566
        %v1896 = vunpack.c.l.b16 %v1567
        %v1897 = vunpack.c.l.b16 %v1568
        %v1898 = vunpack.c.l.b16 %v1569
        %v1899 = vunpack.c.l.b16 %v1570
        %v1900 = vpack.c.b16 %v1885, %v1884
        %v1901 = vpack.c.b16 %v1887, %v1886
        %v1902 = vpack.c.b16 %v1889, %v1888
        %v1903 = vpack.c.b16 %v1891, %v1890
        %v1904 = vpack.c.b16 %v1893, %v1892
        %v1905 = vpack.c.b16 %v1895, %v1894
        %v1906 = vpack.c.b16 %v1897, %v1896
        %v1907 = vpack.c.b16 %v1899, %v1898
        %1916 = vmatpush.bf16.msra.mxu0 %v1907
        %1917 = vmatpush.bf16.msra.mxu0 %v1906
        %1918 = vmatpush.bf16.msra.mxu0 %v1905
        %1919 = vmatpush.bf16.msra.mxu0 %v1904
        %1920 = vmatpush.bf16.msra.mxu0 %v1903
        %1921 = vmatpush.bf16.msra.mxu0 %v1902
        %1922 = vmatpush.bf16.msra.mxu0 %v1901
        %1923 = vmatpush.bf16.msra.mxu0 %v1900
        %1924 = vmatmul.bf16.gmra.mxu0 %v1860
        %v1925 = vpop.f32.mrf.mxu0
        %v1926 = vadd.f32 0.0, %v1925
        %v1927 = vpop.f32.mrf.mxu0
        %v1928 = vadd.f32 0.0, %v1927
        %1929 = vmatmul.bf16.gmra.mxu0 %v1861
        %v1930 = vpop.f32.mrf.mxu0
        %v1931 = vadd.f32 0.0, %v1930
        %v1932 = vpop.f32.mrf.mxu0
        %v1933 = vadd.f32 0.0, %v1932
        %1934 = vmatmul.bf16.gmra.mxu0 %v1862
        %v1935 = vpop.f32.mrf.mxu0
        %v1936 = vadd.f32 0.0, %v1935
        %v1937 = vpop.f32.mrf.mxu0
        %v1938 = vadd.f32 0.0, %v1937
        %1939 = vmatmul.bf16.gmra.mxu0 %v1863
        %v1940 = vpop.f32.mrf.mxu0
        %v1941 = vadd.f32 0.0, %v1940
        %v1942 = vpop.f32.mrf.mxu0
        %v1943 = vadd.f32 0.0, %v1942
        %1944 = vmatmul.bf16.gmra.mxu0 %v1864
        %v1945 = vpop.f32.mrf.mxu0
        %v1946 = vadd.f32 0.0, %v1945
        %v1947 = vpop.f32.mrf.mxu0
        %v1948 = vadd.f32 0.0, %v1947
        %1949 = vmatmul.bf16.gmra.mxu0 %v1865
        %v1950 = vpop.f32.mrf.mxu0
        %v1951 = vadd.f32 0.0, %v1950
        %v1952 = vpop.f32.mrf.mxu0
        %v1953 = vadd.f32 0.0, %v1952
        %1954 = vmatmul.bf16.gmra.mxu0 %v1866
        %v1955 = vpop.f32.mrf.mxu0
        %v1956 = vadd.f32 0.0, %v1955
        %v1957 = vpop.f32.mrf.mxu0
        %v1958 = vadd.f32 0.0, %v1957
        %1959 = vmatmul.bf16.gmra.mxu0 %v1867
        %v1960 = vpop.f32.mrf.mxu0
        %v1961 = vadd.f32 0.0, %v1960
        %v1962 = vpop.f32.mrf.mxu0
        %v1963 = vadd.f32 0.0, %v1962
        %1964 = vdwg.mxu0
        %v1965 = vadd.f32 %v1796, %v1926
        %v1966 = vadd.f32 %v1797, %v1928
        %v1967 = vadd.f32 %v1798, %v1931
        %v1968 = vadd.f32 %v1799, %v1933
        %v1969 = vadd.f32 %v1800, %v1936
        %v1970 = vadd.f32 %v1801, %v1938
        %v1971 = vadd.f32 %v1802, %v1941
        %v1972 = vadd.f32 %v1803, %v1943
        %v1973 = vadd.f32 %v1804, %v1946
        %v1974 = vadd.f32 %v1805, %v1948
        %v1975 = vadd.f32 %v1806, %v1951
        %v1976 = vadd.f32 %v1807, %v1953
        %v1977 = vadd.f32 %v1808, %v1956
        %v1978 = vadd.f32 %v1809, %v1958
        %v1979 = vadd.f32 %v1810, %v1961
        %v1980 = vadd.f32 %v1811, %v1963
        %s1981 = scalar_lea.vmem [#allocation4], 64
        %v1982 = vld [vmem:[%s1981] sm:$0xf]
        %v1983 = vld [vmem:[%s1981 + $0x4] sm:$0xf]
        %v1984 = vld [vmem:[%s1981 + $0x8] sm:$0xf]
        %v1985 = vld [vmem:[%s1981 + $0xc] sm:$0xf]
        %v1986 = vld [vmem:[%s1981 + $0x10] sm:$0xf]
        %v1987 = vld [vmem:[%s1981 + $0x14] sm:$0xf]
        %v1988 = vld [vmem:[%s1981 + $0x18] sm:$0xf]
        %v1989 = vld [vmem:[%s1981 + $0x1c] sm:$0xf]
        %v1990 = vld [vmem:[%s1981 + $0x20] sm:$0xf]
        %v1991 = vld [vmem:[%s1981 + $0x24] sm:$0xf]
        %v1992 = vld [vmem:[%s1981 + $0x28] sm:$0xf]
        %v1993 = vld [vmem:[%s1981 + $0x2c] sm:$0xf]
        %v1994 = vld [vmem:[%s1981 + $0x30] sm:$0xf]
        %v1995 = vld [vmem:[%s1981 + $0x34] sm:$0xf]
        %v1996 = vld [vmem:[%s1981 + $0x38] sm:$0xf]
        %v1997 = vld [vmem:[%s1981 + $0x3c] sm:$0xf]
        %s1998 = scalar_lea.vmem [#allocation5], 64
        %v1999 = vld [vmem:[%s1998] sm:$0xf]
        %v2000 = vld [vmem:[%s1998 + $0x4] sm:$0xf]
        %v2001 = vld [vmem:[%s1998 + $0x8] sm:$0xf]
        %v2002 = vld [vmem:[%s1998 + $0xc] sm:$0xf]
        %v2003 = vld [vmem:[%s1998 + $0x10] sm:$0xf]
        %v2004 = vld [vmem:[%s1998 + $0x14] sm:$0xf]
        %v2005 = vld [vmem:[%s1998 + $0x18] sm:$0xf]
        %v2006 = vld [vmem:[%s1998 + $0x1c] sm:$0xf]
        %v2007 = vld [vmem:[%s1998 + $0x20] sm:$0xf]
        %v2008 = vld [vmem:[%s1998 + $0x24] sm:$0xf]
        %v2009 = vld [vmem:[%s1998 + $0x28] sm:$0xf]
        %v2010 = vld [vmem:[%s1998 + $0x2c] sm:$0xf]
        %v2011 = vld [vmem:[%s1998 + $0x30] sm:$0xf]
        %v2012 = vld [vmem:[%s1998 + $0x34] sm:$0xf]
        %v2013 = vld [vmem:[%s1998 + $0x38] sm:$0xf]
        %v2014 = vld [vmem:[%s1998 + $0x3c] sm:$0xf]
        %v2031 = vunpack.c.l.b16 %v1982
        %v2032 = vunpack.c.l.b16 %v1983
        %v2033 = vunpack.c.l.b16 %v1984
        %v2034 = vunpack.c.l.b16 %v1985
        %v2035 = vunpack.c.l.b16 %v1986
        %v2036 = vunpack.c.l.b16 %v1987
        %v2037 = vunpack.c.l.b16 %v1988
        %v2038 = vunpack.c.l.b16 %v1989
        %v2039 = vunpack.c.l.b16 %v1990
        %v2040 = vunpack.c.l.b16 %v1991
        %v2041 = vunpack.c.l.b16 %v1992
        %v2042 = vunpack.c.l.b16 %v1993
        %v2043 = vunpack.c.l.b16 %v1994
        %v2044 = vunpack.c.l.b16 %v1995
        %v2045 = vunpack.c.l.b16 %v1996
        %v2046 = vunpack.c.l.b16 %v1997
        %v2047 = vpack.c.b16 %v2032, %v2031
        %v2048 = vpack.c.b16 %v2034, %v2033
        %v2049 = vpack.c.b16 %v2036, %v2035
        %v2050 = vpack.c.b16 %v2038, %v2037
        %v2051 = vpack.c.b16 %v2040, %v2039
        %v2052 = vpack.c.b16 %v2042, %v2041
        %v2053 = vpack.c.b16 %v2044, %v2043
        %v2054 = vpack.c.b16 %v2046, %v2045
        %2063 = vmatpush.bf16.xpose.msra.mxu0 %v2054
        %2064 = vmatpush.bf16.xpose.msra.mxu0 %v2053
        %2065 = vmatpush.bf16.xpose.msra.mxu0 %v2052
        %2066 = vmatpush.bf16.xpose.msra.mxu0 %v2051
        %2067 = vmatpush.bf16.xpose.msra.mxu0 %v2050
        %2068 = vmatpush.bf16.xpose.msra.mxu0 %v2049
        %2069 = vmatpush.bf16.xpose.msra.mxu0 %v2048
        %2070 = vmatpush.bf16.xpose.msra.mxu0 %v2047
        %2071 = vmatmul.bf16.gmra.mxu0 %v1531
        %v2072 = vpop.f32.mrf.mxu0
        %v2073 = vadd.f32 0.0, %v2072
        %v2074 = vpop.f32.mrf.mxu0
        %v2075 = vadd.f32 0.0, %v2074
        %2076 = vmatmul.bf16.gmra.mxu0 %v1532
        %v2077 = vpop.f32.mrf.mxu0
        %v2078 = vadd.f32 0.0, %v2077
        %v2079 = vpop.f32.mrf.mxu0
        %v2080 = vadd.f32 0.0, %v2079
        %2081 = vmatmul.bf16.gmra.mxu0 %v1533
        %v2082 = vpop.f32.mrf.mxu0
        %v2083 = vadd.f32 0.0, %v2082
        %v2084 = vpop.f32.mrf.mxu0
        %v2085 = vadd.f32 0.0, %v2084
        %2086 = vmatmul.bf16.gmra.mxu0 %v1534
        %v2087 = vpop.f32.mrf.mxu0
        %v2088 = vadd.f32 0.0, %v2087
        %v2089 = vpop.f32.mrf.mxu0
        %v2090 = vadd.f32 0.0, %v2089
        %2091 = vmatmul.bf16.gmra.mxu0 %v1535
        %v2092 = vpop.f32.mrf.mxu0
        %v2093 = vadd.f32 0.0, %v2092
        %v2094 = vpop.f32.mrf.mxu0
        %v2095 = vadd.f32 0.0, %v2094
        %2096 = vmatmul.bf16.gmra.mxu0 %v1536
        %v2097 = vpop.f32.mrf.mxu0
        %v2098 = vadd.f32 0.0, %v2097
        %v2099 = vpop.f32.mrf.mxu0
        %v2100 = vadd.f32 0.0, %v2099
        %2101 = vmatmul.bf16.gmra.mxu0 %v1537
        %v2102 = vpop.f32.mrf.mxu0
        %v2103 = vadd.f32 0.0, %v2102
        %v2104 = vpop.f32.mrf.mxu0
        %v2105 = vadd.f32 0.0, %v2104
        %2106 = vmatmul.bf16.gmra.mxu0 %v1538
        %v2107 = vpop.f32.mrf.mxu0
        %v2108 = vadd.f32 0.0, %v2107
        %v2109 = vpop.f32.mrf.mxu0
        %v2110 = vadd.f32 0.0, %v2109
        %2111 = vdwg.mxu0
        %2112 = vmax.xlane.f32.xlu0 %v2073
        %v2113 = vpop.xlane.xlu0 %2112
        %2114 = vmax.xlane.f32.xlu0 %v2075
        %v2115 = vpop.xlane.xlu0 %2114
        %2116 = vmax.xlane.f32.xlu0 %v2078
        %v2117 = vpop.xlane.xlu0 %2116
        %2118 = vmax.xlane.f32.xlu0 %v2080
        %v2119 = vpop.xlane.xlu0 %2118
        %2120 = vmax.xlane.f32.xlu0 %v2083
        %v2121 = vpop.xlane.xlu0 %2120
        %2122 = vmax.xlane.f32.xlu0 %v2085
        %v2123 = vpop.xlane.xlu0 %2122
        %2124 = vmax.xlane.f32.xlu0 %v2088
        %v2125 = vpop.xlane.xlu0 %2124
        %2126 = vmax.xlane.f32.xlu0 %v2090
        %v2127 = vpop.xlane.xlu0 %2126
        %2128 = vmax.xlane.f32.xlu0 %v2093
        %v2129 = vpop.xlane.xlu0 %2128
        %2130 = vmax.xlane.f32.xlu0 %v2095
        %v2131 = vpop.xlane.xlu0 %2130
        %2132 = vmax.xlane.f32.xlu0 %v2098
        %v2133 = vpop.xlane.xlu0 %2132
        %2134 = vmax.xlane.f32.xlu0 %v2100
        %v2135 = vpop.xlane.xlu0 %2134
        %2136 = vmax.xlane.f32.xlu0 %v2103
        %v2137 = vpop.xlane.xlu0 %2136
        %2138 = vmax.xlane.f32.xlu0 %v2105
        %v2139 = vpop.xlane.xlu0 %2138
        %2140 = vmax.xlane.f32.xlu0 %v2108
        %v2141 = vpop.xlane.xlu0 %2140
        %2142 = vmax.xlane.f32.xlu0 %v2110
        %v2143 = vpop.xlane.xlu0 %2142
        %v2144 = vmax.f32 %v1669, %v2113
        %v2145 = vmax.f32 %v1671, %v2115
        %v2146 = vmax.f32 %v1673, %v2117
        %v2147 = vmax.f32 %v1675, %v2119
        %v2148 = vmax.f32 %v1677, %v2121
        %v2149 = vmax.f32 %v1679, %v2123
        %v2150 = vmax.f32 %v1681, %v2125
        %v2151 = vmax.f32 %v1683, %v2127
        %v2152 = vmax.f32 %v1685, %v2129
        %v2153 = vmax.f32 %v1687, %v2131
        %v2154 = vmax.f32 %v1689, %v2133
        %v2155 = vmax.f32 %v1691, %v2135
        %v2156 = vmax.f32 %v1693, %v2137
        %v2157 = vmax.f32 %v1695, %v2139
        %v2158 = vmax.f32 %v1697, %v2141
        %v2159 = vmax.f32 %v1699, %v2143
        %v2160 = vsub.f32 %v1669, %v2144
        %v2161 = vsub.f32 %v1671, %v2145
        %v2162 = vsub.f32 %v1673, %v2146
        %v2163 = vsub.f32 %v1675, %v2147
        %v2164 = vsub.f32 %v1677, %v2148
        %v2165 = vsub.f32 %v1679, %v2149
        %v2166 = vsub.f32 %v1681, %v2150
        %v2167 = vsub.f32 %v1683, %v2151
        %v2168 = vsub.f32 %v1685, %v2152
        %v2169 = vsub.f32 %v1687, %v2153
        %v2170 = vsub.f32 %v1689, %v2154
        %v2171 = vsub.f32 %v1691, %v2155
        %v2172 = vsub.f32 %v1693, %v2156
        %v2173 = vsub.f32 %v1695, %v2157
        %v2174 = vsub.f32 %v1697, %v2158
        %v2175 = vsub.f32 %v1699, %v2159
        %v2176 = vmul.f32 %v2160, 1.442695
        %v2177 = vpow.pop %v2176
        %v2178 = vmul.f32 %v2161, 1.442695
        %v2179 = vpow.pop %v2178
        %v2180 = vmul.f32 %v2162, 1.442695
        %v2181 = vpow.pop %v2180
        %v2182 = vmul.f32 %v2163, 1.442695
        %v2183 = vpow.pop %v2182
        %v2184 = vmul.f32 %v2164, 1.442695
        %v2185 = vpow.pop %v2184
        %v2186 = vmul.f32 %v2165, 1.442695
        %v2187 = vpow.pop %v2186
        %v2188 = vmul.f32 %v2166, 1.442695
        %v2189 = vpow.pop %v2188
        %v2190 = vmul.f32 %v2167, 1.442695
        %v2191 = vpow.pop %v2190
        %v2192 = vmul.f32 %v2168, 1.442695
        %v2193 = vpow.pop %v2192
        %v2194 = vmul.f32 %v2169, 1.442695
        %v2195 = vpow.pop %v2194
        %v2196 = vmul.f32 %v2170, 1.442695
        %v2197 = vpow.pop %v2196
        %v2198 = vmul.f32 %v2171, 1.442695
        %v2199 = vpow.pop %v2198
        %v2200 = vmul.f32 %v2172, 1.442695
        %v2201 = vpow.pop %v2200
        %v2202 = vmul.f32 %v2173, 1.442695
        %v2203 = vpow.pop %v2202
        %v2204 = vmul.f32 %v2174, 1.442695
        %v2205 = vpow.pop %v2204
        %v2206 = vmul.f32 %v2175, 1.442695
        %v2207 = vpow.pop %v2206
        %v2208 = vsub.f32 %v2073, %v2144
        %v2209 = vsub.f32 %v2075, %v2145
        %v2210 = vsub.f32 %v2078, %v2146
        %v2211 = vsub.f32 %v2080, %v2147
        %v2212 = vsub.f32 %v2083, %v2148
        %v2213 = vsub.f32 %v2085, %v2149
        %v2214 = vsub.f32 %v2088, %v2150
        %v2215 = vsub.f32 %v2090, %v2151
        %v2216 = vsub.f32 %v2093, %v2152
        %v2217 = vsub.f32 %v2095, %v2153
        %v2218 = vsub.f32 %v2098, %v2154
        %v2219 = vsub.f32 %v2100, %v2155
        %v2220 = vsub.f32 %v2103, %v2156
        %v2221 = vsub.f32 %v2105, %v2157
        %v2222 = vsub.f32 %v2108, %v2158
        %v2223 = vsub.f32 %v2110, %v2159
        %v2224 = vmul.f32 %v2208, 1.442695
        %v2225 = vpow.pop %v2224
        %v2226 = vmul.f32 %v2209, 1.442695
        %v2227 = vpow.pop %v2226
        %v2228 = vmul.f32 %v2210, 1.442695
        %v2229 = vpow.pop %v2228
        %v2230 = vmul.f32 %v2211, 1.442695
        %v2231 = vpow.pop %v2230
        %v2232 = vmul.f32 %v2212, 1.442695
        %v2233 = vpow.pop %v2232
        %v2234 = vmul.f32 %v2213, 1.442695
        %v2235 = vpow.pop %v2234
        %v2236 = vmul.f32 %v2214, 1.442695
        %v2237 = vpow.pop %v2236
        %v2238 = vmul.f32 %v2215, 1.442695
        %v2239 = vpow.pop %v2238
        %v2240 = vmul.f32 %v2216, 1.442695
        %v2241 = vpow.pop %v2240
        %v2242 = vmul.f32 %v2217, 1.442695
        %v2243 = vpow.pop %v2242
        %v2244 = vmul.f32 %v2218, 1.442695
        %v2245 = vpow.pop %v2244
        %v2246 = vmul.f32 %v2219, 1.442695
        %v2247 = vpow.pop %v2246
        %v2248 = vmul.f32 %v2220, 1.442695
        %v2249 = vpow.pop %v2248
        %v2250 = vmul.f32 %v2221, 1.442695
        %v2251 = vpow.pop %v2250
        %v2252 = vmul.f32 %v2222, 1.442695
        %v2253 = vpow.pop %v2252
        %v2254 = vmul.f32 %v2223, 1.442695
        %v2255 = vpow.pop %v2254
        %v2256 = vmul.f32 %v2177, %v1844
        %v2257 = vmul.f32 %v2179, %v1845
        %v2258 = vmul.f32 %v2181, %v1846
        %v2259 = vmul.f32 %v2183, %v1847
        %v2260 = vmul.f32 %v2185, %v1848
        %v2261 = vmul.f32 %v2187, %v1849
        %v2262 = vmul.f32 %v2189, %v1850
        %v2263 = vmul.f32 %v2191, %v1851
        %v2264 = vmul.f32 %v2193, %v1852
        %v2265 = vmul.f32 %v2195, %v1853
        %v2266 = vmul.f32 %v2197, %v1854
        %v2267 = vmul.f32 %v2199, %v1855
        %v2268 = vmul.f32 %v2201, %v1856
        %v2269 = vmul.f32 %v2203, %v1857
        %v2270 = vmul.f32 %v2205, %v1858
        %v2271 = vmul.f32 %v2207, %v1859
        %2272 = vadd.xlane.f32.xlu0 %v2225
        %v2273 = vpop.xlane.xlu0 %2272
        %2274 = vadd.xlane.f32.xlu0 %v2227
        %v2275 = vpop.xlane.xlu0 %2274
        %2276 = vadd.xlane.f32.xlu0 %v2229
        %v2277 = vpop.xlane.xlu0 %2276
        %2278 = vadd.xlane.f32.xlu0 %v2231
        %v2279 = vpop.xlane.xlu0 %2278
        %2280 = vadd.xlane.f32.xlu0 %v2233
        %v2281 = vpop.xlane.xlu0 %2280
        %2282 = vadd.xlane.f32.xlu0 %v2235
        %v2283 = vpop.xlane.xlu0 %2282
        %2284 = vadd.xlane.f32.xlu0 %v2237
        %v2285 = vpop.xlane.xlu0 %2284
        %2286 = vadd.xlane.f32.xlu0 %v2239
        %v2287 = vpop.xlane.xlu0 %2286
        %2288 = vadd.xlane.f32.xlu0 %v2241
        %v2289 = vpop.xlane.xlu0 %2288
        %2290 = vadd.xlane.f32.xlu0 %v2243
        %v2291 = vpop.xlane.xlu0 %2290
        %2292 = vadd.xlane.f32.xlu0 %v2245
        %v2293 = vpop.xlane.xlu0 %2292
        %2294 = vadd.xlane.f32.xlu0 %v2247
        %v2295 = vpop.xlane.xlu0 %2294
        %2296 = vadd.xlane.f32.xlu0 %v2249
        %v2297 = vpop.xlane.xlu0 %2296
        %2298 = vadd.xlane.f32.xlu0 %v2251
        %v2299 = vpop.xlane.xlu0 %2298
        %2300 = vadd.xlane.f32.xlu0 %v2253
        %v2301 = vpop.xlane.xlu0 %2300
        %2302 = vadd.xlane.f32.xlu0 %v2255
        %v2303 = vpop.xlane.xlu0 %2302
        %v2304 = vadd.f32 %v2256, %v2273
        %v2305 = vadd.f32 %v2257, %v2275
        %v2306 = vadd.f32 %v2258, %v2277
        %v2307 = vadd.f32 %v2259, %v2279
        %v2308 = vadd.f32 %v2260, %v2281
        %v2309 = vadd.f32 %v2261, %v2283
        %v2310 = vadd.f32 %v2262, %v2285
        %v2311 = vadd.f32 %v2263, %v2287
        %v2312 = vadd.f32 %v2264, %v2289
        %v2313 = vadd.f32 %v2265, %v2291
        %v2314 = vadd.f32 %v2266, %v2293
        %v2315 = vadd.f32 %v2267, %v2295
        %v2316 = vadd.f32 %v2268, %v2297
        %v2317 = vadd.f32 %v2269, %v2299
        %v2318 = vadd.f32 %v2270, %v2301
        %v2319 = vadd.f32 %v2271, %v2303
        %v2320 = vmul.f32 %v2177, %v1965
        %v2321 = vmul.f32 %v2179, %v1966
        %v2322 = vmul.f32 %v2181, %v1967
        %v2323 = vmul.f32 %v2183, %v1968
        %v2324 = vmul.f32 %v2185, %v1969
        %v2325 = vmul.f32 %v2187, %v1970
        %v2326 = vmul.f32 %v2189, %v1971
        %v2327 = vmul.f32 %v2191, %v1972
        %v2328 = vmul.f32 %v2193, %v1973
        %v2329 = vmul.f32 %v2195, %v1974
        %v2330 = vmul.f32 %v2197, %v1975
        %v2331 = vmul.f32 %v2199, %v1976
        %v2332 = vmul.f32 %v2201, %v1977
        %v2333 = vmul.f32 %v2203, %v1978
        %v2334 = vmul.f32 %v2205, %v1979
        %v2335 = vmul.f32 %v2207, %v1980
        %v2336 = vpack.c.bf16 %v2227, %v2225
        %v2337 = vpack.c.bf16 %v2231, %v2229
        %v2338 = vpack.c.bf16 %v2235, %v2233
        %v2339 = vpack.c.bf16 %v2239, %v2237
        %v2340 = vpack.c.bf16 %v2243, %v2241
        %v2341 = vpack.c.bf16 %v2247, %v2245
        %v2342 = vpack.c.bf16 %v2251, %v2249
        %v2343 = vpack.c.bf16 %v2255, %v2253
        %v2360 = vunpack.c.l.b16 %v1999
        %v2361 = vunpack.c.l.b16 %v2000
        %v2362 = vunpack.c.l.b16 %v2001
        %v2363 = vunpack.c.l.b16 %v2002
        %v2364 = vunpack.c.l.b16 %v2003
        %v2365 = vunpack.c.l.b16 %v2004
        %v2366 = vunpack.c.l.b16 %v2005
        %v2367 = vunpack.c.l.b16 %v2006
        %v2368 = vunpack.c.l.b16 %v2007
        %v2369 = vunpack.c.l.b16 %v2008
        %v2370 = vunpack.c.l.b16 %v2009
        %v2371 = vunpack.c.l.b16 %v2010
        %v2372 = vunpack.c.l.b16 %v2011
        %v2373 = vunpack.c.l.b16 %v2012
        %v2374 = vunpack.c.l.b16 %v2013
        %v2375 = vunpack.c.l.b16 %v2014
        %v2376 = vpack.c.b16 %v2361, %v2360
        %v2377 = vpack.c.b16 %v2363, %v2362
        %v2378 = vpack.c.b16 %v2365, %v2364
        %v2379 = vpack.c.b16 %v2367, %v2366
        %v2380 = vpack.c.b16 %v2369, %v2368
        %v2381 = vpack.c.b16 %v2371, %v2370
        %v2382 = vpack.c.b16 %v2373, %v2372
        %v2383 = vpack.c.b16 %v2375, %v2374
        %2392 = vmatpush.bf16.msra.mxu0 %v2383
        %2393 = vmatpush.bf16.msra.mxu0 %v2382
        %2394 = vmatpush.bf16.msra.mxu0 %v2381
        %2395 = vmatpush.bf16.msra.mxu0 %v2380
        %2396 = vmatpush.bf16.msra.mxu0 %v2379
        %2397 = vmatpush.bf16.msra.mxu0 %v2378
        %2398 = vmatpush.bf16.msra.mxu0 %v2377
        %2399 = vmatpush.bf16.msra.mxu0 %v2376
        %2400 = vmatmul.bf16.gmra.mxu0 %v2336
        %v2401 = vpop.f32.mrf.mxu0
        %v2402 = vadd.f32 0.0, %v2401
        %v2403 = vpop.f32.mrf.mxu0
        %v2404 = vadd.f32 0.0, %v2403
        %2405 = vmatmul.bf16.gmra.mxu0 %v2337
        %v2406 = vpop.f32.mrf.mxu0
        %v2407 = vadd.f32 0.0, %v2406
        %v2408 = vpop.f32.mrf.mxu0
        %v2409 = vadd.f32 0.0, %v2408
        %2410 = vmatmul.bf16.gmra.mxu0 %v2338
        %v2411 = vpop.f32.mrf.mxu0
        %v2412 = vadd.f32 0.0, %v2411
        %v2413 = vpop.f32.mrf.mxu0
        %v2414 = vadd.f32 0.0, %v2413
        %2415 = vmatmul.bf16.gmra.mxu0 %v2339
        %v2416 = vpop.f32.mrf.mxu0
        %v2417 = vadd.f32 0.0, %v2416
        %v2418 = vpop.f32.mrf.mxu0
        %v2419 = vadd.f32 0.0, %v2418
        %2420 = vmatmul.bf16.gmra.mxu0 %v2340
        %v2421 = vpop.f32.mrf.mxu0
        %v2422 = vadd.f32 0.0, %v2421
        %v2423 = vpop.f32.mrf.mxu0
        %v2424 = vadd.f32 0.0, %v2423
        %2425 = vmatmul.bf16.gmra.mxu0 %v2341
        %v2426 = vpop.f32.mrf.mxu0
        %v2427 = vadd.f32 0.0, %v2426
        %v2428 = vpop.f32.mrf.mxu0
        %v2429 = vadd.f32 0.0, %v2428
        %2430 = vmatmul.bf16.gmra.mxu0 %v2342
        %v2431 = vpop.f32.mrf.mxu0
        %v2432 = vadd.f32 0.0, %v2431
        %v2433 = vpop.f32.mrf.mxu0
        %v2434 = vadd.f32 0.0, %v2433
        %2435 = vmatmul.bf16.gmra.mxu0 %v2343
        %v2436 = vpop.f32.mrf.mxu0
        %v2437 = vadd.f32 0.0, %v2436
        %v2438 = vpop.f32.mrf.mxu0
        %v2439 = vadd.f32 0.0, %v2438
        %2440 = vdwg.mxu0
        %v2441 = vadd.f32 %v2320, %v2402
        %v2442 = vadd.f32 %v2321, %v2404
        %v2443 = vadd.f32 %v2322, %v2407
        %v2444 = vadd.f32 %v2323, %v2409
        %v2445 = vadd.f32 %v2324, %v2412
        %v2446 = vadd.f32 %v2325, %v2414
        %v2447 = vadd.f32 %v2326, %v2417
        %v2448 = vadd.f32 %v2327, %v2419
        %v2449 = vadd.f32 %v2328, %v2422
        %v2450 = vadd.f32 %v2329, %v2424
        %v2451 = vadd.f32 %v2330, %v2427
        %v2452 = vadd.f32 %v2331, %v2429
        %v2453 = vadd.f32 %v2332, %v2432
        %v2454 = vadd.f32 %v2333, %v2434
        %v2455 = vadd.f32 %v2334, %v2437
        %v2456 = vadd.f32 %v2335, %v2439
        %v2457 = vrcp.pop %v2304
        %v2458 = vrcp.pop %v2305
        %v2459 = vrcp.pop %v2306
        %v2460 = vrcp.pop %v2307
        %v2461 = vrcp.pop %v2308
        %v2462 = vrcp.pop %v2309
        %v2463 = vrcp.pop %v2310
        %v2464 = vrcp.pop %v2311
        %v2465 = vrcp.pop %v2312
        %v2466 = vrcp.pop %v2313
        %v2467 = vrcp.pop %v2314
        %v2468 = vrcp.pop %v2315
        %v2469 = vrcp.pop %v2316
        %v2470 = vrcp.pop %v2317
        %v2471 = vrcp.pop %v2318
        %v2472 = vrcp.pop %v2319
        %v2473 = vmul.f32 %v2441, %v2457
        %v2474 = vmul.f32 %v2442, %v2458
        %v2475 = vmul.f32 %v2443, %v2459
        %v2476 = vmul.f32 %v2444, %v2460
        %v2477 = vmul.f32 %v2445, %v2461
        %v2478 = vmul.f32 %v2446, %v2462
        %v2479 = vmul.f32 %v2447, %v2463
        %v2480 = vmul.f32 %v2448, %v2464
        %v2481 = vmul.f32 %v2449, %v2465
        %v2482 = vmul.f32 %v2450, %v2466
        %v2483 = vmul.f32 %v2451, %v2467
        %v2484 = vmul.f32 %v2452, %v2468
        %v2485 = vmul.f32 %v2453, %v2469
        %v2486 = vmul.f32 %v2454, %v2470
        %v2487 = vmul.f32 %v2455, %v2471
        %v2488 = vmul.f32 %v2456, %v2472
        %v2489 = vpack.c.bf16 %v2474, %v2473
        %v2490 = vpack.c.bf16 %v2476, %v2475
        %v2491 = vpack.c.bf16 %v2478, %v2477
        %v2492 = vpack.c.bf16 %v2480, %v2479
        %v2493 = vpack.c.bf16 %v2482, %v2481
        %v2494 = vpack.c.bf16 %v2484, %v2483
        %v2495 = vpack.c.bf16 %v2486, %v2485
        %v2496 = vpack.c.bf16 %v2488, %v2487
        %v2497 = vld [vmem:[#allocation17] sm:$0xf]
        %v2498 = vld [vmem:[#allocation17 + $0x4] sm:$0xf]
        %v2499 = vld [vmem:[#allocation17 + $0x8] sm:$0xf]
        %v2500 = vld [vmem:[#allocation17 + $0xc] sm:$0xf]
        %v2501 = vld [vmem:[#allocation17 + $0x10] sm:$0xf]
        %v2502 = vld [vmem:[#allocation17 + $0x14] sm:$0xf]
        %v2503 = vld [vmem:[#allocation17 + $0x18] sm:$0xf]
        %v2504 = vld [vmem:[#allocation17 + $0x1c] sm:$0xf]
        %v2505 = vld [vmem:[#allocation17 + $0x20] sm:$0xf]
        %v2506 = vld [vmem:[#allocation17 + $0x24] sm:$0xf]
        %v2507 = vld [vmem:[#allocation17 + $0x28] sm:$0xf]
        %v2508 = vld [vmem:[#allocation17 + $0x2c] sm:$0xf]
        %v2509 = vld [vmem:[#allocation17 + $0x30] sm:$0xf]
        %v2510 = vld [vmem:[#allocation17 + $0x34] sm:$0xf]
        %v2511 = vld [vmem:[#allocation17 + $0x38] sm:$0xf]
        %v2512 = vld [vmem:[#allocation17 + $0x3c] sm:$0xf]
        %v2513 = vld [vmem:[%s12] sm:$0x1]
        %v2515 = vperm.slane %v2513, 0
        %v2533 = vunpack.c.l.b16 %v2497
        %v2534 = vunpack.c.l.b16 %v2498
        %v2535 = vunpack.c.l.b16 %v2499
        %v2536 = vunpack.c.l.b16 %v2500
        %v2537 = vunpack.c.l.b16 %v2501
        %v2538 = vunpack.c.l.b16 %v2502
        %v2539 = vunpack.c.l.b16 %v2503
        %v2540 = vunpack.c.l.b16 %v2504
        %v2541 = vunpack.c.l.b16 %v2505
        %v2542 = vunpack.c.l.b16 %v2506
        %v2543 = vunpack.c.l.b16 %v2507
        %v2544 = vunpack.c.l.b16 %v2508
        %v2545 = vunpack.c.l.b16 %v2509
        %v2546 = vunpack.c.l.b16 %v2510
        %v2547 = vunpack.c.l.b16 %v2511
        %v2548 = vunpack.c.l.b16 %v2512
        %v2549 = vpack.c.b16 %v2534, %v2533
        %v2550 = vpack.c.b16 %v2536, %v2535
        %v2551 = vpack.c.b16 %v2538, %v2537
        %v2552 = vpack.c.b16 %v2540, %v2539
        %v2553 = vpack.c.b16 %v2542, %v2541
        %v2554 = vpack.c.b16 %v2544, %v2543
        %v2555 = vpack.c.b16 %v2546, %v2545
        %v2556 = vpack.c.b16 %v2548, %v2547
        %2565 = vmatpush.bf16.msra.mxu0 %v2556
        %2566 = vmatpush.bf16.msra.mxu0 %v2555
        %2567 = vmatpush.bf16.msra.mxu0 %v2554
        %2568 = vmatpush.bf16.msra.mxu0 %v2553
        %2569 = vmatpush.bf16.msra.mxu0 %v2552
        %2570 = vmatpush.bf16.msra.mxu0 %v2551
        %2571 = vmatpush.bf16.msra.mxu0 %v2550
        %2572 = vmatpush.bf16.msra.mxu0 %v2549
        %2573 = vmatmul.bf16.gmra.mxu0 %v2489
        %v2574 = vpop.f32.mrf.mxu0
        %v2575 = vadd.f32 %v2515, %v2574
        %v2576 = vpop.f32.mrf.mxu0
        %v2577 = vadd.f32 %v2515, %v2576
        %2578 = vmatmul.bf16.gmra.mxu0 %v2490
        %v2579 = vpop.f32.mrf.mxu0
        %v2580 = vadd.f32 %v2515, %v2579
        %v2581 = vpop.f32.mrf.mxu0
        %v2582 = vadd.f32 %v2515, %v2581
        %2583 = vmatmul.bf16.gmra.mxu0 %v2491
        %v2584 = vpop.f32.mrf.mxu0
        %v2585 = vadd.f32 %v2515, %v2584
        %v2586 = vpop.f32.mrf.mxu0
        %v2587 = vadd.f32 %v2515, %v2586
        %2588 = vmatmul.bf16.gmra.mxu0 %v2492
        %v2589 = vpop.f32.mrf.mxu0
        %v2590 = vadd.f32 %v2515, %v2589
        %v2591 = vpop.f32.mrf.mxu0
        %v2592 = vadd.f32 %v2515, %v2591
        %2593 = vmatmul.bf16.gmra.mxu0 %v2493
        %v2594 = vpop.f32.mrf.mxu0
        %v2595 = vadd.f32 %v2515, %v2594
        %v2596 = vpop.f32.mrf.mxu0
        %v2597 = vadd.f32 %v2515, %v2596
        %2598 = vmatmul.bf16.gmra.mxu0 %v2494
        %v2599 = vpop.f32.mrf.mxu0
        %v2600 = vadd.f32 %v2515, %v2599
        %v2601 = vpop.f32.mrf.mxu0
        %v2602 = vadd.f32 %v2515, %v2601
        %2603 = vmatmul.bf16.gmra.mxu0 %v2495
        %v2604 = vpop.f32.mrf.mxu0
        %v2605 = vadd.f32 %v2515, %v2604
        %v2606 = vpop.f32.mrf.mxu0
        %v2607 = vadd.f32 %v2515, %v2606
        %2608 = vmatmul.bf16.gmra.mxu0 %v2496
        %v2609 = vpop.f32.mrf.mxu0
        %v2610 = vadd.f32 %v2515, %v2609
        %v2611 = vpop.f32.mrf.mxu0
        %v2612 = vadd.f32 %v2515, %v2611
        %2613 = vdwg.mxu0
        %v2614 = vadd.f32 %v1352, %v2575
        %v2615 = vadd.f32 %v1353, %v2577
        %v2616 = vadd.f32 %v1354, %v2580
        %v2617 = vadd.f32 %v1355, %v2582
        %v2618 = vadd.f32 %v1356, %v2585
        %v2619 = vadd.f32 %v1357, %v2587
        %v2620 = vadd.f32 %v1358, %v2590
        %v2621 = vadd.f32 %v1359, %v2592
        %v2622 = vadd.f32 %v1360, %v2595
        %v2623 = vadd.f32 %v1361, %v2597
        %v2624 = vadd.f32 %v1362, %v2600
        %v2625 = vadd.f32 %v1363, %v2602
        %v2626 = vadd.f32 %v1364, %v2605
        %v2627 = vadd.f32 %v1365, %v2607
        %v2628 = vadd.f32 %v1366, %v2610
        %v2629 = vadd.f32 %v1367, %v2612
        %2630 = vst [vmem:[%s602] sm:$0xff] %v2614
        %2631 = vst [vmem:[%s602 + $0x8] sm:$0xff] %v2615
        %2632 = vst [vmem:[%s602 + $0x10] sm:$0xff] %v2616
        %2633 = vst [vmem:[%s602 + $0x18] sm:$0xff] %v2617
        %2634 = vst [vmem:[%s602 + $0x20] sm:$0xff] %v2618
        %2635 = vst [vmem:[%s602 + $0x28] sm:$0xff] %v2619
        %2636 = vst [vmem:[%s602 + $0x30] sm:$0xff] %v2620
        %2637 = vst [vmem:[%s602 + $0x38] sm:$0xff] %v2621
        %2638 = vst [vmem:[%s602 + $0x40] sm:$0xff] %v2622
        %2639 = vst [vmem:[%s602 + $0x48] sm:$0xff] %v2623
        %2640 = vst [vmem:[%s602 + $0x50] sm:$0xff] %v2624
        %2641 = vst [vmem:[%s602 + $0x58] sm:$0xff] %v2625
        %2642 = vst [vmem:[%s602 + $0x60] sm:$0xff] %v2626
        %2643 = vst [vmem:[%s602 + $0x68] sm:$0xff] %v2627
        %2644 = vst [vmem:[%s602 + $0x70] sm:$0xff] %v2628
        %2645 = vst [vmem:[%s602 + $0x78] sm:$0xff] %v2629
        %s2646 = sand.u32 %s342, 1
        %s2647 = scalar_lea.sflag [#allocation8], %s2646
        %s2648 = sand.u32 %s342, 1
        %s2649 = smul.addr %s2648, 128
        %s2650 = scalar_lea.vmem [#allocation18], %s2649
        // Predicated region
        $region105: #{tpu_custom_call.1} parent=71 // pred_check
          %p2651 = pneg %p352
        $region106: #{tpu_custom_call.1} parent=71 // pred_check_branch
          %2653 = sbr.rel (%p2651) target = $region108
        $region107: #{tpu_custom_call.1} parent=71 // pred_region
          %s2654 = smul.u32 16, %s40
          %2656 = vsyncadd %s2647, 0
          %s2657 = smul.addr %s39, 32
          %s2658 = sadd.s32 %s2654, %s2657
          %s2659 = smul.addr %s2658, 8
          %s2660 = scalar_lea.hbm %s13, %s2659
          %s2661 = sshll.u32 %s2650, 4
          %s2662 = int_to_ptr.vmem [resolvable:$true] %s2661
          %s2663 = sshll.u32 %s2660, 4
          %s2664 = int_to_ptr.hbm [resolvable:$true] %s2663
          %2669 = dma.vmem_to_hbm [thread:$0]  %s2662, 2048, %s2664, %s2647, 128, 128, 8
        $region108: #{tpu_custom_call.1} parent=71 // pred_fallthru
          _
      $region72: #{tpu_custom_call.1} parent=5 // pred_fallthru
        _
      %p2670 = scmp.le.s32.totalorder 2, %s30
      // Predicated region
      $region109: #{tpu_custom_call.1} parent=5 // pred_check
        %p2671 = pneg %p2670
      $region110: #{tpu_custom_call.1} parent=5 // pred_check_branch
        %2673 = sbr.rel (%p2671) target = $region112
      $region111: #{tpu_custom_call.1} parent=5 // pred_region
        %s2674 = ssub.s32 %s30, 2
        // Predicated region
        $region113: #{tpu_custom_call.1} parent=111 // pred_check
          %p2675 = pneg %p358
        $region114: #{tpu_custom_call.1} parent=111 // pred_check_branch
          %2677 = sbr.rel (%p2675) target = $region116
        $region115: #{tpu_custom_call.1} parent=111 // pred_region
          %s2678 = sand.u32 %s343, 1
          %s2679 = scalar_lea.sflag [#allocation8], %s2678
          %s2680 = sand.u32 %s343, 1
          %s2681 = smul.addr %s2680, 128
          %s2682 = scalar_lea.vmem [#allocation18], %s2681
          %2684 = dma.done %s2679, 2048
        $region116: #{tpu_custom_call.1} parent=111 // pred_fallthru
          _
      $region112: #{tpu_custom_call.1} parent=5 // pred_fallthru
        _
    $region6: #{tpu_custom_call.1} parent=1 // loop_footer
      %s34 = sadd.s32 1, %s30
    $region7: #{tpu_custom_call.1} parent=1 // loop_footer_branch
      %29 = sbr.rel target = $region3
    $region8: #{tpu_custom_call.1} parent=1 // loop_exit
      _
    %2685 = vsyncpa [#allocation7], 1
    %s2686 = scalar_lea.sflag [#allocation7], 1
    %2687 = vsyncpa %s2686, 1
    %2688 = vsyncpa [#allocation10], 1
    %s2689 = scalar_lea.sflag [#allocation10], 1
    %2690 = vsyncpa %s2689, 1
    %2691 = vsyncpa [#allocation13], 1
    %2692 = vsyncpa [#allocation16], 1
    %2693 = vsyncpa [#allocation8], 1
    %s2694 = scalar_lea.sflag [#allocation8], 1
    %2695 = vsyncpa %s2694, 1

</llo_original>
